<compile_context>
chip_gen: v7x
topology: tpu7x:2x2x1
jax: 0.10.0
libtpu: 0.0.40
codegen_flags: <defaults>
</compile_context>

<pallas_src>
import functools
import math

import jax
import jax.numpy as jnp
from jax.experimental import pallas as pl
from jax.experimental.pallas import tpu as pltpu


def _round_up(n, m):
    return ((n + m - 1) // m) * m


def _sensory_kernel(x_ref, w1_ref, b1_ref, w2_ref, p_ref, o_ref, acc_ref, *, gelu_approx):
    """One (TILE_B, H) batch tile x one chunk of the 2H hidden dimension."""
    k = pl.program_id(1)

    @pl.when(k == 0)
    def _init():
        acc_ref[...] = jnp.zeros_like(acc_ref)

    # ---- Linear1 chunk: (TB, H) @ (H, C) + (1, C); f32 accumulation on the MXU ----
    h = jnp.dot(x_ref[...], w1_ref[...], preferred_element_type=jnp.float32)
    h = h + b1_ref[...].astype(jnp.float32)

    # ---- GELU in f32.  Exact erf matches nn.GELU(); tanh approx (optional) moves
    #      the transcendental to the otherwise-idle EUP slot for small H. ----
    if gelu_approx:
        c = math.sqrt(2.0 / math.pi)
        h = 0.5 * h * (1.0 + jnp.tanh(c * (h + 0.044715 * h * h * h)))
    else:
        h = 0.5 * h * (1.0 + jax.lax.erf(h * (1.0 / math.sqrt(2.0))))

    # ---- Linear2 chunk: (TB, C) @ (C, H), accumulated into the f32 scratch.
    #      (On the bf16 path the GELU output is quantized to bf16 here: intentional.) ----
    acc_ref[...] += jnp.dot(h.astype(w2_ref.dtype), w2_ref[...],
                            preferred_element_type=jnp.float32)

    # ---- Finalize: bias2 + two-pass LayerNorm (eps=1e-5) + affine, lane-dense store ----
    @pl.when(k == pl.num_programs(1) - 1)
    def _finalize():
        p = p_ref[...]                      # (3, H): [b2; gamma; beta], f32
        y = acc_ref[...] + p[0:1, :]
        mu = jnp.mean(y, axis=-1, keepdims=True)
        d = y - mu
        var = jnp.mean(d * d, axis=-1, keepdims=True)
        o_ref[...] = (d * jax.lax.rsqrt(var + 1e-5) * p[1:2, :] + p[2:3, :]).astype(o_ref.dtype)


def _vmem_bytes(tile_b, chunk, num_k, H, w_itemsize, x_itemsize, single_buffer_invariants):
    """Honest working-set estimate (counts real buffer counts, sublane padding)."""
    inv_buf = 1 if (single_buffer_invariants and num_k == 1) else 2
    p_buf = 1 if single_buffer_invariants else 2
    total = 0
    total += H * chunk * w_itemsize * inv_buf          # w1 block(s)
    total += chunk * H * w_itemsize * inv_buf          # w2 block(s)
    total += 8 * chunk * 4 * inv_buf                   # b1 block(s) (padded to 8 sublanes)
    total += 8 * H * 4 * p_buf                         # packed b2/gamma/beta
    total += tile_b * H * x_itemsize * 2               # x tile, double-buffered
    total += tile_b * H * 4 * 2                        # out tile, double-buffered
    total += tile_b * H * 4                            # f32 accumulator scratch
    total += tile_b * chunk * 4 * 2                    # Linear1 / GELU f32 temporaries
    return total


def sensory_processor(x, w1, b1, w2, b2, gamma, beta, *, tile_b=512,
                      matmul_dtype=jnp.bfloat16, gelu_approx=False, max_chunk=None):
    """x: (B, H).  w1: (H, 2H), b1: (2H,), w2: (2H, H), b2/gamma/beta: (H,).

    matmul_dtype: compute dtype for the two matmuls (default bf16, MXU-native);
                  accumulation and all elementwise math stay in f32.
                  Pass jnp.float32 for a bit-faithful (but slower) path.
    max_chunk:    optional cap on the 2H chunk size (forces the streamed-weights path).
    """
    B, H = x.shape
    H2 = 2 * H
    assert w1.shape == (H, H2) and w2.shape == (H2, H)
    if H % 128 != 0:
        raise ValueError(f"hidden_dim={H} must be a multiple of 128 (lane-dense tiles)")

    out_dtype = x.dtype
    if matmul_dtype is not None:
        w1 = w1.astype(matmul_dtype)
        w2 = w2.astype(matmul_dtype)
        x = x.astype(matmul_dtype)          # halves x DMA + VMEM on the bf16 path
    w_itemsize = jnp.dtype(w1.dtype).itemsize
    x_itemsize = jnp.dtype(x.dtype).itemsize

    # ---- Generation-aware VMEM budget ----
    try:
        phys = int(pltpu.get_tpu_info().vmem_capacity_bytes)
    except Exception:
        phys = 64 << 20
    if phys >= (96 << 20):                  # v5e / v6e: 128 MiB physical
        budget = min(phys - (28 << 20), 100 << 20)
    else:                                   # v7x: 64 MiB per TensorCore
        budget = max(min(phys - (12 << 20), 52 << 20), 16 << 20)

    # ---- Batch tiling: minimize padding, >= 2 steps when possible (v7x: 2 TCs) ----
    target = _round_up(max(8, min(int(tile_b), _round_up(B, 8))), 8)
    num_b = max(pl.cdiv(B, target), 1)
    if B >= 16 and num_b < 2:
        num_b = 2
    tb = _round_up(pl.cdiv(B, num_b), 8)

    # ---- 2H chunking: largest chunk whose working set fits the budget ----
    cands = [c for c in range(H2, 0, -128) if H2 % c == 0]
    if max_chunk is not None:
        cands = [c for c in cands if c <= max(int(max_chunk), 128)] or [128]
    headroom = 2 << 20
    sel = None
    while sel is None:
        for c in cands:
            nk = H2 // c
            if _vmem_bytes(tb, c, nk, H, w_itemsize, x_itemsize, True) + headroom <= budget:
                sel = (tb, c, nk)
                break
        if sel is None:
            if tb > 8:
                tb = _round_up(max(8, tb // 2), 8)
            else:
                sel = (8, cands[-1], H2 // cands[-1])   # best effort
    tb, chunk, num_k = sel

    num_b = pl.cdiv(B, tb)
    B_pad = num_b * tb
    if B_pad != B:
        x = jnp.pad(x, ((0, B_pad - B), (0, 0)))

    b1_2d = b1.reshape(1, H2).astype(jnp.float32)
    packed = jnp.stack([b2, gamma, beta], axis=0).astype(jnp.float32)   # (3, H)

    cost = pl.CostEstimate(
        flops=4 * B_pad * H * H2,
        transcendentals=B_pad * H2,
        bytes_accessed=(B_pad * H * (x_itemsize + 4)
                        + (w1.size + w2.size) * w_itemsize + (H2 + 3 * H) * 4),
    )
    kernel = functools.partial(_sensory_kernel, gelu_approx=gelu_approx)

    def _run(single_buffer_invariants):
        needed = _vmem_bytes(tb, chunk, num_k, H, w_itemsize, x_itemsize,
                             single_buffer_invariants)
        vmem_limit = int(min(budget, max(needed + (6 << 20), 24 << 20)))

        def inv_spec(shape, index_map):
            if single_buffer_invariants:
                return pl.BlockSpec(shape, index_map, pipeline_mode=pl.Buffered(1))
            return pl.BlockSpec(shape, index_map)

        # w1/b1/w2 blocks are grid-invariant only when the 2H axis is a single step.
        w_spec = inv_spec if num_k == 1 else (lambda s, m: pl.BlockSpec(s, m))

        return pl.pallas_call(
            kernel,
            out_shape=jax.ShapeDtypeStruct((B_pad, H), out_dtype),
            grid=(num_b, num_k),
            in_specs=[
                pl.BlockSpec((tb, H), lambda i, k: (i, 0)),       # x: tiled over batch
                w_spec((H, chunk), lambda i, k: (0, k)),          # w1 chunk
                w_spec((1, chunk), lambda i, k: (0, k)),          # b1 chunk
                w_spec((chunk, H), lambda i, k: (k, 0)),          # w2 chunk
                inv_spec((3, H), lambda i, k: (0, 0)),            # b2 / gamma / beta
            ],
            out_specs=pl.BlockSpec((tb, H), lambda i, k: (i, 0)),
            scratch_shapes=[pltpu.VMEM((tb, H), jnp.float32)],    # Linear2 accumulator
            compiler_params=pltpu.CompilerParams(
                dimension_semantics=("parallel", "arbitrary"),
                vmem_limit_bytes=vmem_limit,
            ),
            cost_estimate=cost,
        )(x, w1, b1_2d, w2, packed)

    try:
        out = _run(True)
    except Exception:
        # Fallback if single-buffering (pl.Buffered(1)) is rejected by this runtime.
        out = _run(False)

    return out[:B] if B_pad != B else out


def _init_params(key, hidden_dim):
    """Deterministic init mimicking nn.Linear defaults (uniform +/- 1/sqrt(fan_in))."""
    k1, k2, k3, k4 = jax.random.split(key, 4)
    h, h2 = hidden_dim, 2 * hidden_dim
    bound1 = 1.0 / math.sqrt(h)
    bound2 = 1.0 / math.sqrt(h2)
    # Stored already transposed to (in, out) for x @ W.
    w1 = jax.random.uniform(k1, (h, h2), jnp.float32, -bound1, bound1)
    b1 = jax.random.uniform(k2, (h2,), jnp.float32, -bound1, bound1)
    w2 = jax.random.uniform(k3, (h2, h), jnp.float32, -bound2, bound2)
    b2 = jax.random.uniform(k4, (h,), jnp.float32, -bound2, bound2)
    gamma = jnp.ones((h,), jnp.float32)   # LayerNorm weight init
    beta = jnp.zeros((h,), jnp.float32)   # LayerNorm bias init
    return w1, b1, w2, b2, gamma, beta


def _reference(x, w1, b1, w2, b2, gamma, beta):
    h = x @ w1 + b1
    h = 0.5 * h * (1.0 + jax.lax.erf(h / math.sqrt(2.0)))
    y = h @ w2 + b2
    mu = jnp.mean(y, axis=-1, keepdims=True)
    var = jnp.mean((y - mu) ** 2, axis=-1, keepdims=True)
    return (y - mu) * jax.lax.rsqrt(var + 1e-5) * gamma + beta


if __name__ == "__main__":
    hidden_dim = 128
    batch = 20   # not a tile multiple -> exercises padding; >=16 -> two batch-grid steps

    key = jax.random.PRNGKey(0)
    k_x, k_p = jax.random.split(key)
    x = jax.random.normal(k_x, (batch, hidden_dim), jnp.float32)
    params = _init_params(k_p, hidden_dim)
    ref = _reference(x, *params)

    # Exact f32-matmul path (bit-faithful to the PyTorch module), resident weights.
    out_f32 = sensory_processor(x, *params, matmul_dtype=jnp.float32)
    jax.block_until_ready(out_f32)
    assert out_f32.shape == (batch, hidden_dim)
    assert jnp.allclose(out_f32, ref, atol=1e-4, rtol=1e-4), "f32 kernel mismatch"

    # f32 path with the 2H dim split over the reduction grid axis (large-H fallback).
    out_split = sensory_processor(x, *params, matmul_dtype=jnp.float32, max_chunk=128)
    jax.block_until_ready(out_split)
    assert jnp.allclose(out_split, ref, atol=1e-4, rtol=1e-4), "split-2H kernel mismatch"

    # Default bf16-MXU path (f32 accumulation); numerics-visible -> looser tolerance.
    out_bf16 = sensory_processor(x, *params)
    jax.block_until_ready(out_bf16)
    assert jnp.allclose(out_bf16, ref, atol=5e-2, rtol=5e-2), "bf16 kernel mismatch"

    print("KERNEL_OK")
</pallas_src>

<mosaic_0001>
module attributes {stable_mosaic.version = 11 : i64} {
  func.func @_sensory_kernel(%arg0: i32, %arg1: i32, %arg2: memref<16x128xf32, #tpu.memory_space<vmem>>, %arg3: memref<128x256xf32, #tpu.memory_space<vmem>>, %arg4: memref<1x256xf32, #tpu.memory_space<vmem>>, %arg5: memref<256x128xf32, #tpu.memory_space<vmem>>, %arg6: memref<3x128xf32, #tpu.memory_space<vmem>>, %arg7: memref<16x128xf32, #tpu.memory_space<vmem>>, %arg8: memref<16x128xf32, #tpu.memory_space<vmem>>) attributes {dimension_semantics = [#tpu.dimension_semantics<parallel>, #tpu.dimension_semantics<arbitrary>], iteration_bounds = array<i64: 2, 1>, scalar_prefetch = 0 : i64, scratch_operands = 1 : i64, tpu.core_type = #tpu.core_type<tc>, window_params = [{transform_indices = @transform_0, window_bounds = array<i64: 16, 128>}, {pipeline_mode = #tpu.pipeline_mode<synchronous>, transform_indices = @transform_1, window_bounds = array<i64: 128, 256>}, {pipeline_mode = #tpu.pipeline_mode<synchronous>, transform_indices = @transform_2, window_bounds = array<i64: 1, 256>}, {pipeline_mode = #tpu.pipeline_mode<synchronous>, transform_indices = @transform_3, window_bounds = array<i64: 256, 128>}, {pipeline_mode = #tpu.pipeline_mode<synchronous>, transform_indices = @transform_4, window_bounds = array<i64: 3, 128>}, {transform_indices = @transform_5, window_bounds = array<i64: 16, 128>}]} {
    %c0_i32 = arith.constant 0 : i32
    %0 = arith.cmpi eq, %arg1, %c0_i32 : i32
    %1 = arith.extui %0 : i1 to i32
    %c0_i32_0 = arith.constant 0 : i32
    %2 = arith.cmpi ne, %1, %c0_i32_0 : i32
    scf.if %2 {
      %cst_18 = arith.constant 0.000000e+00 : f32
      %25 = vector.broadcast %cst_18 : f32 to vector<16x128xf32>
      %c0_19 = arith.constant 0 : index
      %c0_20 = arith.constant 0 : index
      %26 = vector.load %arg8[%c0_19, %c0_20] : memref<16x128xf32, #tpu.memory_space<vmem>>, vector<16x128xf32>
      tpu.vector_store %arg8[%c0_19, %c0_20], %25 {strides = array<i32>} : memref<16x128xf32, #tpu.memory_space<vmem>>, vector<16x128xf32>,
    } else {
    }
    %c0 = arith.constant 0 : index
    %c0_1 = arith.constant 0 : index
    %3 = vector.load %arg2[%c0, %c0_1] : memref<16x128xf32, #tpu.memory_space<vmem>>, vector<16x128xf32>
    %c0_2 = arith.constant 0 : index
    %c0_3 = arith.constant 0 : index
    %4 = vector.load %arg3[%c0_2, %c0_3] : memref<128x256xf32, #tpu.memory_space<vmem>>, vector<128x256xf32>
    %cst = arith.constant dense<0.000000e+00> : vector<16x256xf32>
    %5 = tpu.matmul %3, %4, %cst {dimension_numbers = #tpu.dot_dimension_numbers<[1], [0], [0], [1], [0, 0, 1, 1], [], []>} : vector<16x128xf32>, vector<128x256xf32>, vector<16x256xf32> -> vector<16x256xf32>
    %c0_4 = arith.constant 0 : index
    %c0_5 = arith.constant 0 : index
    %6 = vector.load %arg4[%c0_4, %c0_5] : memref<1x256xf32, #tpu.memory_space<vmem>>, vector<1x256xf32>
    %7 = vector.broadcast %6 : vector<1x256xf32> to vector<16x256xf32>
    %8 = arith.addf %5, %7 : vector<16x256xf32>
    %cst_6 = arith.constant 5.000000e-01 : f32
    %9 = vector.broadcast %cst_6 : f32 to vector<16x256xf32>
    %10 = arith.mulf %9, %8 : vector<16x256xf32>
    %cst_7 = arith.constant 0.707106769 : f32
    %11 = vector.broadcast %cst_7 : f32 to vector<16x256xf32>
    %12 = arith.mulf %8, %11 : vector<16x256xf32>
    %13 = math.erf %12 : vector<16x256xf32>
    %cst_8 = arith.constant 1.000000e+00 : f32
    %14 = vector.broadcast %cst_8 : f32 to vector<16x256xf32>
    %15 = arith.addf %14, %13 : vector<16x256xf32>
    %16 = arith.mulf %10, %15 : vector<16x256xf32>
    %c0_9 = arith.constant 0 : index
    %c0_10 = arith.constant 0 : index
    %17 = vector.load %arg8[%c0_9, %c0_10] : memref<16x128xf32, #tpu.memory_space<vmem>>, vector<16x128xf32>
    %c0_11 = arith.constant 0 : index
    %c0_12 = arith.constant 0 : index
    %18 = vector.load %arg5[%c0_11, %c0_12] : memref<256x128xf32, #tpu.memory_space<vmem>>, vector<256x128xf32>
    %cst_13 = arith.constant dense<0.000000e+00> : vector<16x128xf32>
    %19 = tpu.matmul %16, %18, %cst_13 {dimension_numbers = #tpu.dot_dimension_numbers<[1], [0], [0], [1], [0, 0, 1, 1], [], []>} : vector<16x256xf32>, vector<256x128xf32>, vector<16x128xf32> -> vector<16x128xf32>
    %20 = arith.addf %17, %19 : vector<16x128xf32>
    %c0_14 = arith.constant 0 : index
    %c0_15 = arith.constant 0 : index
    %21 = vector.load %arg8[%c0_14, %c0_15] : memref<16x128xf32, #tpu.memory_space<vmem>>, vector<16x128xf32>
    tpu.vector_store %arg8[%c0_14, %c0_15], %20 {strides = array<i32>} : memref<16x128xf32, #tpu.memory_space<vmem>>, vector<16x128xf32>,
    %c0_i32_16 = arith.constant 0 : i32
    %22 = arith.cmpi eq, %arg1, %c0_i32_16 : i32
    %23 = arith.extui %22 : i1 to i32
    %c0_i32_17 = arith.constant 0 : i32
    %24 = arith.cmpi ne, %23, %c0_i32_17 : i32
    scf.if %24 {
      %c0_18 = arith.constant 0 : index
      %c0_19 = arith.constant 0 : index
      %25 = vector.load %arg6[%c0_18, %c0_19] : memref<3x128xf32, #tpu.memory_space<vmem>>, vector<3x128xf32>
      %c0_20 = arith.constant 0 : index
      %c0_21 = arith.constant 0 : index
      %26 = vector.load %arg8[%c0_20, %c0_21] : memref<16x128xf32, #tpu.memory_space<vmem>>, vector<16x128xf32>
      %27 = vector.extract_strided_slice %25 {offsets = [0, 0], sizes = [1, 128], strides = [1, 1]} : vector<3x128xf32> to vector<1x128xf32>
      %28 = vector.broadcast %27 : vector<1x128xf32> to vector<16x128xf32>
      %29 = arith.addf %26, %28 : vector<16x128xf32>
      %cst_22 = arith.constant dense<0.000000e+00> : vector<16xf32>
      %30 = vector.multi_reduction <add>, %29, %cst_22 [1] : vector<16x128xf32> to vector<16xf32>
      %31 = vector.shape_cast %30 : vector<16xf32> to vector<16x1xf32>
      %cst_23 = arith.constant 1.280000e+02 : f32
      %32 = vector.broadcast %cst_23 : f32 to vector<16x1xf32>
      %33 = arith.divf %31, %32 : vector<16x1xf32>
      %34 = vector.broadcast %33 : vector<16x1xf32> to vector<16x128xf32>
      %35 = arith.subf %29, %34 : vector<16x128xf32>
      %36 = arith.mulf %35, %35 : vector<16x128xf32>
      %cst_24 = arith.constant dense<0.000000e+00> : vector<16xf32>
      %37 = vector.multi_reduction <add>, %36, %cst_24 [1] : vector<16x128xf32> to vector<16xf32>
      %38 = vector.shape_cast %37 : vector<16xf32> to vector<16x1xf32>
      %cst_25 = arith.constant 1.280000e+02 : f32
      %39 = vector.broadcast %cst_25 : f32 to vector<16x1xf32>
      %40 = arith.divf %38, %39 : vector<16x1xf32>
      %cst_26 = arith.constant 9.99999974E-6 : f32
      %41 = vector.broadcast %cst_26 : f32 to vector<16x1xf32>
      %42 = arith.addf %40, %41 : vector<16x1xf32>
      %43 = math.rsqrt %42 : vector<16x1xf32>
      %44 = vector.broadcast %43 : vector<16x1xf32> to vector<16x128xf32>
      %45 = arith.mulf %35, %44 : vector<16x128xf32>
      %46 = vector.extract_strided_slice %25 {offsets = [1, 0], sizes = [1, 128], strides = [1, 1]} : vector<3x128xf32> to vector<1x128xf32>
      %47 = vector.broadcast %46 : vector<1x128xf32> to vector<16x128xf32>
      %48 = arith.mulf %45, %47 : vector<16x128xf32>
      %49 = vector.extract_strided_slice %25 {offsets = [2, 0], sizes = [1, 128], strides = [1, 1]} : vector<3x128xf32> to vector<1x128xf32>
      %50 = vector.broadcast %49 : vector<1x128xf32> to vector<16x128xf32>
      %51 = arith.addf %48, %50 : vector<16x128xf32>
      %c0_27 = arith.constant 0 : index
      %c0_28 = arith.constant 0 : index
      %52 = vector.load %arg7[%c0_27, %c0_28] : memref<16x128xf32, #tpu.memory_space<vmem>>, vector<16x128xf32>
      tpu.vector_store %arg7[%c0_27, %c0_28], %51 {strides = array<i32>} : memref<16x128xf32, #tpu.memory_space<vmem>>, vector<16x128xf32>,
    } else {
    }
    return
  }
  func.func @transform_0(%arg0: i32, %arg1: i32) -> (i32, i32) {
    %c0_i32 = arith.constant 0 : i32
    %c0_i32_0 = arith.constant 0 : i32
    return %arg0, %c0_i32 : i32, i32
  }
  func.func @transform_1(%arg0: i32, %arg1: i32) -> (i32, i32) {
    %c0_i32 = arith.constant 0 : i32
    %c0_i32_0 = arith.constant 0 : i32
    return %c0_i32, %arg1 : i32, i32
  }
  func.func @transform_2(%arg0: i32, %arg1: i32) -> (i32, i32) {
    %c0_i32 = arith.constant 0 : i32
    %c0_i32_0 = arith.constant 0 : i32
    return %c0_i32, %arg1 : i32, i32
  }
  func.func @transform_3(%arg0: i32, %arg1: i32) -> (i32, i32) {
    %c0_i32 = arith.constant 0 : i32
    %c0_i32_0 = arith.constant 0 : i32
    return %arg1, %c0_i32 : i32, i32
  }
  func.func @transform_4(%arg0: i32, %arg1: i32) -> (i32, i32) {
    %c0_i32 = arith.constant 0 : i32
    %c0_i32_0 = arith.constant 0 : i32
    %c0_i32_1 = arith.constant 0 : i32
    return %c0_i32, %c0_i32_0 : i32, i32
  }
  func.func @transform_5(%arg0: i32, %arg1: i32) -> (i32, i32) {
    %c0_i32 = arith.constant 0 : i32
    %c0_i32_0 = arith.constant 0 : i32
    return %arg0, %c0_i32 : i32, i32
  }
}

module attributes {stable_mosaic.version = 11 : i64} {
  func.func @_sensory_kernel(%arg0: i32, %arg1: i32, %arg2: memref<16x128xf32, #tpu.memory_space<vmem>>, %arg3: memref<128x256xf32, #tpu.memory_space<vmem>>, %arg4: memref<1x256xf32, #tpu.memory_space<vmem>>, %arg5: memref<256x128xf32, #tpu.memory_space<vmem>>, %arg6: memref<3x128xf32, #tpu.memory_space<vmem>>, %arg7: memref<16x128xf32, #tpu.memory_space<vmem>>, %arg8: memref<16x128xf32, #tpu.memory_space<vmem>>) attributes {dimension_semantics = [#tpu.dimension_semantics<parallel>, #tpu.dimension_semantics<arbitrary>], iteration_bounds = array<i64: 2, 1>, scalar_prefetch = 0 : i64, scratch_operands = 1 : i64, tpu.core_type = #tpu.core_type<tc>, window_params = [{transform_indices = @transform_0, window_bounds = array<i64: 16, 128>}, {transform_indices = @transform_1, window_bounds = array<i64: 128, 256>}, {transform_indices = @transform_2, window_bounds = array<i64: 1, 256>}, {transform_indices = @transform_3, window_bounds = array<i64: 256, 128>}, {pipeline_mode = #tpu.pipeline_mode<synchronous>, transform_indices = @transform_4, window_bounds = array<i64: 3, 128>}, {transform_indices = @transform_5, window_bounds = array<i64: 16, 128>}]} {
    %c0_i32 = arith.constant 0 : i32
    %0 = arith.cmpi eq, %arg1, %c0_i32 : i32
    %1 = arith.extui %0 : i1 to i32
    %c0_i32_0 = arith.constant 0 : i32
    %2 = arith.cmpi ne, %1, %c0_i32_0 : i32
    scf.if %2 {
      %cst_18 = arith.constant 0.000000e+00 : f32
      %25 = vector.broadcast %cst_18 : f32 to vector<16x128xf32>
      %c0_19 = arith.constant 0 : index
      %c0_20 = arith.constant 0 : index
      %26 = vector.load %arg8[%c0_19, %c0_20] : memref<16x128xf32, #tpu.memory_space<vmem>>, vector<16x128xf32>
      tpu.vector_store %arg8[%c0_19, %c0_20], %25 {strides = array<i32>} : memref<16x128xf32, #tpu.memory_space<vmem>>, vector<16x128xf32>,
    } else {
    }
    %c0 = arith.constant 0 : index
    %c0_1 = arith.constant 0 : index
    %3 = vector.load %arg2[%c0, %c0_1] : memref<16x128xf32, #tpu.memory_space<vmem>>, vector<16x128xf32>
    %c0_2 = arith.constant 0 : index
    %c0_3 = arith.constant 0 : index
    %4 = vector.load %arg3[%c0_2, %c0_3] : memref<128x256xf32, #tpu.memory_space<vmem>>, vector<128x256xf32>
    %cst = arith.constant dense<0.000000e+00> : vector<16x256xf32>
    %5 = tpu.matmul %3, %4, %cst {dimension_numbers = #tpu.dot_dimension_numbers<[1], [0], [0], [1], [0, 0, 1, 1], [], []>} : vector<16x128xf32>, vector<128x256xf32>, vector<16x256xf32> -> vector<16x256xf32>
    %c0_4 = arith.constant 0 : index
    %c0_5 = arith.constant 0 : index
    %6 = vector.load %arg4[%c0_4, %c0_5] : memref<1x256xf32, #tpu.memory_space<vmem>>, vector<1x256xf32>
    %7 = vector.broadcast %6 : vector<1x256xf32> to vector<16x256xf32>
    %8 = arith.addf %5, %7 : vector<16x256xf32>
    %cst_6 = arith.constant 5.000000e-01 : f32
    %9 = vector.broadcast %cst_6 : f32 to vector<16x256xf32>
    %10 = arith.mulf %9, %8 : vector<16x256xf32>
    %cst_7 = arith.constant 0.707106769 : f32
    %11 = vector.broadcast %cst_7 : f32 to vector<16x256xf32>
    %12 = arith.mulf %8, %11 : vector<16x256xf32>
    %13 = math.erf %12 : vector<16x256xf32>
    %cst_8 = arith.constant 1.000000e+00 : f32
    %14 = vector.broadcast %cst_8 : f32 to vector<16x256xf32>
    %15 = arith.addf %14, %13 : vector<16x256xf32>
    %16 = arith.mulf %10, %15 : vector<16x256xf32>
    %c0_9 = arith.constant 0 : index
    %c0_10 = arith.constant 0 : index
    %17 = vector.load %arg8[%c0_9, %c0_10] : memref<16x128xf32, #tpu.memory_space<vmem>>, vector<16x128xf32>
    %c0_11 = arith.constant 0 : index
    %c0_12 = arith.constant 0 : index
    %18 = vector.load %arg5[%c0_11, %c0_12] : memref<256x128xf32, #tpu.memory_space<vmem>>, vector<256x128xf32>
    %cst_13 = arith.constant dense<0.000000e+00> : vector<16x128xf32>
    %19 = tpu.matmul %16, %18, %cst_13 {dimension_numbers = #tpu.dot_dimension_numbers<[1], [0], [0], [1], [0, 0, 1, 1], [], []>} : vector<16x256xf32>, vector<256x128xf32>, vector<16x128xf32> -> vector<16x128xf32>
    %20 = arith.addf %17, %19 : vector<16x128xf32>
    %c0_14 = arith.constant 0 : index
    %c0_15 = arith.constant 0 : index
    %21 = vector.load %arg8[%c0_14, %c0_15] : memref<16x128xf32, #tpu.memory_space<vmem>>, vector<16x128xf32>
    tpu.vector_store %arg8[%c0_14, %c0_15], %20 {strides = array<i32>} : memref<16x128xf32, #tpu.memory_space<vmem>>, vector<16x128xf32>,
    %c0_i32_16 = arith.constant 0 : i32
    %22 = arith.cmpi eq, %arg1, %c0_i32_16 : i32
    %23 = arith.extui %22 : i1 to i32
    %c0_i32_17 = arith.constant 0 : i32
    %24 = arith.cmpi ne, %23, %c0_i32_17 : i32
    scf.if %24 {
      %c0_18 = arith.constant 0 : index
      %c0_19 = arith.constant 0 : index
      %25 = vector.load %arg6[%c0_18, %c0_19] : memref<3x128xf32, #tpu.memory_space<vmem>>, vector<3x128xf32>
      %c0_20 = arith.constant 0 : index
      %c0_21 = arith.constant 0 : index
      %26 = vector.load %arg8[%c0_20, %c0_21] : memref<16x128xf32, #tpu.memory_space<vmem>>, vector<16x128xf32>
      %27 = vector.extract_strided_slice %25 {offsets = [0, 0], sizes = [1, 128], strides = [1, 1]} : vector<3x128xf32> to vector<1x128xf32>
      %28 = vector.broadcast %27 : vector<1x128xf32> to vector<16x128xf32>
      %29 = arith.addf %26, %28 : vector<16x128xf32>
      %cst_22 = arith.constant dense<0.000000e+00> : vector<16xf32>
      %30 = vector.multi_reduction <add>, %29, %cst_22 [1] : vector<16x128xf32> to vector<16xf32>
      %31 = vector.shape_cast %30 : vector<16xf32> to vector<16x1xf32>
      %cst_23 = arith.constant 1.280000e+02 : f32
      %32 = vector.broadcast %cst_23 : f32 to vector<16x1xf32>
      %33 = arith.divf %31, %32 : vector<16x1xf32>
      %34 = vector.broadcast %33 : vector<16x1xf32> to vector<16x128xf32>
      %35 = arith.subf %29, %34 : vector<16x128xf32>
      %36 = arith.mulf %35, %35 : vector<16x128xf32>
      %cst_24 = arith.constant dense<0.000000e+00> : vector<16xf32>
      %37 = vector.multi_reduction <add>, %36, %cst_24 [1] : vector<16x128xf32> to vector<16xf32>
      %38 = vector.shape_cast %37 : vector<16xf32> to vector<16x1xf32>
      %cst_25 = arith.constant 1.280000e+02 : f32
      %39 = vector.broadcast %cst_25 : f32 to vector<16x1xf32>
      %40 = arith.divf %38, %39 : vector<16x1xf32>
      %cst_26 = arith.constant 9.99999974E-6 : f32
      %41 = vector.broadcast %cst_26 : f32 to vector<16x1xf32>
      %42 = arith.addf %40, %41 : vector<16x1xf32>
      %43 = math.rsqrt %42 : vector<16x1xf32>
      %44 = vector.broadcast %43 : vector<16x1xf32> to vector<16x128xf32>
      %45 = arith.mulf %35, %44 : vector<16x128xf32>
      %46 = vector.extract_strided_slice %25 {offsets = [1, 0], sizes = [1, 128], strides = [1, 1]} : vector<3x128xf32> to vector<1x128xf32>
      %47 = vector.broadcast %46 : vector<1x128xf32> to vector<16x128xf32>
      %48 = arith.mulf %45, %47 : vector<16x128xf32>
      %49 = vector.extract_strided_slice %25 {offsets = [2, 0], sizes = [1, 128], strides = [1, 1]} : vector<3x128xf32> to vector<1x128xf32>
      %50 = vector.broadcast %49 : vector<1x128xf32> to vector<16x128xf32>
      %51 = arith.addf %48, %50 : vector<16x128xf32>
      %c0_27 = arith.constant 0 : index
      %c0_28 = arith.constant 0 : index
      %52 = vector.load %arg7[%c0_27, %c0_28] : memref<16x128xf32, #tpu.memory_space<vmem>>, vector<16x128xf32>
      tpu.vector_store %arg7[%c0_27, %c0_28], %51 {strides = array<i32>} : memref<16x128xf32, #tpu.memory_space<vmem>>, vector<16x128xf32>,
    } else {
    }
    return
  }
  func.func @transform_0(%arg0: i32, %arg1: i32) -> (i32, i32) {
    %c0_i32 = arith.constant 0 : i32
    %c0_i32_0 = arith.constant 0 : i32
    return %arg0, %c0_i32 : i32, i32
  }
  func.func @transform_1(%arg0: i32, %arg1: i32) -> (i32, i32) {
    %c0_i32 = arith.constant 0 : i32
    %c0_i32_0 = arith.constant 0 : i32
    return %c0_i32, %arg1 : i32, i32
  }
  func.func @transform_2(%arg0: i32, %arg1: i32) -> (i32, i32) {
    %c0_i32 = arith.constant 0 : i32
    %c0_i32_0 = arith.constant 0 : i32
    return %c0_i32, %arg1 : i32, i32
  }
  func.func @transform_3(%arg0: i32, %arg1: i32) -> (i32, i32) {
    %c0_i32 = arith.constant 0 : i32
    %c0_i32_0 = arith.constant 0 : i32
    return %arg1, %c0_i32 : i32, i32
  }
  func.func @transform_4(%arg0: i32, %arg1: i32) -> (i32, i32) {
    %c0_i32 = arith.constant 0 : i32
    %c0_i32_0 = arith.constant 0 : i32
    %c0_i32_1 = arith.constant 0 : i32
    return %c0_i32, %c0_i32_0 : i32, i32
  }
  func.func @transform_5(%arg0: i32, %arg1: i32) -> (i32, i32) {
    %c0_i32 = arith.constant 0 : i32
    %c0_i32_0 = arith.constant 0 : i32
    return %arg0, %c0_i32 : i32, i32
  }
}

</mosaic_0001>

<llo_original>
// kernel: tpu_custom_call.1
$region0: #{tpu_custom_call.1}
  #allocation0 [shape = 'u32[]', space=smem, size = 0x4, offset = 0x4, fixed_abs, tag = 'smem constant byte address 0x4 - core index']
  #allocation1 [shape = 'u32[144,128]{1,0:T(1,128)}', space=vmem, size = 0x12000, scoped, tag = 'internal scratch']
  #allocation2 [shape = 'f32[16,128]{1,0:T(8,128)}', space=vmem, size = 0x2000, scoped, tag = 'scratch operand']
  %s0 = inlined_call_operand.hbm [shape: f32[32,128], index: 0, kind: input, shape index: {}]
  %s1 = inlined_call_operand.hbm [shape: f32[128,256], index: 1, kind: input, shape index: {}]
  %s2 = inlined_call_operand.vmem [shape: f32[1,256], index: 2, kind: input, shape index: {}]
  %s3 = inlined_call_operand.hbm [shape: f32[256,128], index: 3, kind: input, shape index: {}]
  %s4 = inlined_call_operand.vmem [shape: f32[3,128], index: 4, kind: input, shape index: {}]
  %s5 = inlined_call_operand.hbm [shape: f32[32,128], index: 5, kind: output, shape index: {}]
  %s6 = sld [smem:[#allocation0]]
  $region73: #{tpu_custom_call.1} parent=0
    _
  %s8 = ssub.s32 1, %s6
  %s9 = scalar_select 0, %s8, %s6
  $region1: #{tpu_custom_call.1} parent=0
    #allocation3 [shape = 'u8[16384]{0}', space=vmem, size = 0x4000, scoped, tag = 'input window, operand 0']
    #allocation4 [shape = 's32[2]{0}', space=sflag, size = 0x8, scoped, tag = 'scoped memory for tpu_custom_call.1']
    #allocation5 [shape = 's32[2]{0}', space=sflag, size = 0x8, scoped, tag = 'scoped memory for tpu_custom_call.1']
    #allocation6 [shape = 'u8[131072]{0}', space=vmem, size = 0x20000, scoped, tag = 'input window, operand 1, single buffered']
    #allocation7 [shape = 's32[1]{0}', space=sflag, size = 0x4, scoped, tag = 'scoped memory for tpu_custom_call.1']
    #allocation8 [shape = 'u8[131072]{0}', space=vmem, size = 0x20000, scoped, tag = 'input window, operand 3, single buffered']
    #allocation9 [shape = 'u8[16384]{0}', space=vmem, size = 0x4000, scoped, tag = 'output window, operand 0']
    %10 = vsyncpa [#allocation4], 0
    %s11 = scalar_lea.sflag [#allocation4], 1
    %12 = vsyncpa %s11, 0
    %13 = vsyncpa [#allocation7], 0
    %14 = vsyncpa [#allocation5], 0
    %s15 = scalar_lea.sflag [#allocation5], 1
    %16 = vsyncpa %s15, 0
    loop: start=0, step=1, limit=4
    $region2: #{tpu_custom_call.1} parent=1 // loop_pre_header
      _
    $region3: #{tpu_custom_call.1} parent=1 // loop_header
      %s18 = sphi 0, %s22
      %p19 = scmp.ge.s32.totalorder %s18, 4
      %s25 = sphi 0, %s37
      %s26 = sphi 0, %s33
      %s27 = sphi 0, %s25
      %s28 = sphi 0, %s26
      %s29 = sphi 0, %s27
      %s30 = sphi 0, %s28
      %s40 = sphi 0, %s42
      %s43 = sphi 0, %s40
      %s44 = sphi 0, %s43
      %s60 = sphi 0, %s44
      %s66 = sphi 0, %s68
      %s69 = sphi 0, %s66
      %s70 = sphi 0, %s69
      %s86 = sphi 0, %s70
      %s92 = sphi 0, %s94
      %s95 = sphi 0, %s92
      %s96 = sphi 0, %s95
      %s112 = sphi 0, %s96
      %s118 = sphi 0, %s120
      %s121 = sphi 0, %s118
      %s122 = sphi 0, %s121
      %s138 = sphi 0, %s122
      %s142 = sphi 0, %s142
      %s144 = sphi 0, %s142
      %s145 = sphi 0, %s144
      %s159 = sphi 0, %s145
      %s165 = sphi 0, %s167
      %s168 = sphi 0, %s165
      %s169 = sphi 0, %s168
      %s185 = sphi 0, %s169
    $region4: #{tpu_custom_call.1} parent=1 // loop_header_branch
      %21 = sbr.rel (%p19) target = $region8
    $region5: #{tpu_custom_call.1} parent=1 // loop_body
      %s23 = ssub.s32 %s18, 1
      %s24 = ssub.s32 %s18, 2
      %s31 = sadd.s32 1, %s26
      %p32 = scmp.ge.s32.totalorder %s31, 1
      %s33 = scalar_select %p32, 0, %s31
      %s34 = sadd.s32 1, %s25
      %s35 = scalar_select %p32, %s34, %s25
      %p36 = scmp.ge.s32.totalorder %s35, 2
      %s37 = scalar_select %p36, 0, %s35
      %s38 = ssub.s32 %s25, %s37
      %p39 = scmp.eq.s32.totalorder %s38, 0
      %s41 = sadd.s32 %s40, 1
      %s42 = scalar_select %p39, %s40, %s41
      %p45 = pneg %p39
      %p46 = scmp.eq.s32.totalorder %s18, 1
      %p47 = por %p45, %p46
      %p48 = scmp.ne.s32.totalorder %s40, %s43
      %p49 = scmp.eq.s32.totalorder %s18, 0
      %p50 = por %p48, %p49
      %p51 = scmp.ne.s32.totalorder %s40, %s43
      %p52 = scmp.eq.s32.totalorder %s23, 1
      %p53 = por %p51, %p52
      %p54 = scmp.ne.s32.totalorder %s43, %s44
      %p55 = scmp.eq.s32.totalorder %s23, 0
      %p56 = por %p54, %p55
      %p57 = scmp.ne.s32.totalorder %s43, %s44
      %p58 = scmp.eq.s32.totalorder %s24, 1
      %p59 = por %p57, %p58
      %p61 = scmp.ne.s32.totalorder %s44, %s60
      %p62 = scmp.eq.s32.totalorder %s24, 0
      %p63 = por %p61, %p62
      %s64 = ssub.s32 %s26, %s33
      %p65 = scmp.eq.s32.totalorder %s64, 0
      %s67 = sadd.s32 %s66, 1
      %s68 = scalar_select %p65, %s66, %s67
      %p71 = pneg %p65
      %p72 = scmp.eq.s32.totalorder %s18, 1
      %p73 = por %p71, %p72
      %p74 = scmp.ne.s32.totalorder %s66, %s69
      %p75 = scmp.eq.s32.totalorder %s18, 0
      %p76 = por %p74, %p75
      %p77 = scmp.ne.s32.totalorder %s66, %s69
      %p78 = scmp.eq.s32.totalorder %s23, 1
      %p79 = por %p77, %p78
      %p80 = scmp.ne.s32.totalorder %s69, %s70
      %p81 = scmp.eq.s32.totalorder %s23, 0
      %p82 = por %p80, %p81
      %p83 = scmp.ne.s32.totalorder %s69, %s70
      %p84 = scmp.eq.s32.totalorder %s24, 1
      %p85 = por %p83, %p84
      %p87 = scmp.ne.s32.totalorder %s70, %s86
      %p88 = scmp.eq.s32.totalorder %s24, 0
      %p89 = por %p87, %p88
      %s90 = ssub.s32 %s26, %s33
      %p91 = scmp.eq.s32.totalorder %s90, 0
      %s93 = sadd.s32 %s92, 1
      %s94 = scalar_select %p91, %s92, %s93
      %p97 = pneg %p91
      %p98 = scmp.eq.s32.totalorder %s18, 1
      %p99 = por %p97, %p98
      %p100 = scmp.ne.s32.totalorder %s92, %s95
      %p101 = scmp.eq.s32.totalorder %s18, 0
      %p102 = por %p100, %p101
      %p103 = scmp.ne.s32.totalorder %s92, %s95
      %p104 = scmp.eq.s32.totalorder %s23, 1
      %p105 = por %p103, %p104
      %p106 = scmp.ne.s32.totalorder %s95, %s96
      %p107 = scmp.eq.s32.totalorder %s23, 0
      %p108 = por %p106, %p107
      %p109 = scmp.ne.s32.totalorder %s95, %s96
      %p110 = scmp.eq.s32.totalorder %s24, 1
      %p111 = por %p109, %p110
      %p113 = scmp.ne.s32.totalorder %s96, %s112
      %p114 = scmp.eq.s32.totalorder %s24, 0
      %p115 = por %p113, %p114
      %s116 = ssub.s32 %s26, %s33
      %p117 = scmp.eq.s32.totalorder %s116, 0
      %s119 = sadd.s32 %s118, 1
      %s120 = scalar_select %p117, %s118, %s119
      %p123 = pneg %p117
      %p124 = scmp.eq.s32.totalorder %s18, 1
      %p125 = por %p123, %p124
      %p126 = scmp.ne.s32.totalorder %s118, %s121
      %p127 = scmp.eq.s32.totalorder %s18, 0
      %p128 = por %p126, %p127
      %p129 = scmp.ne.s32.totalorder %s118, %s121
      %p130 = scmp.eq.s32.totalorder %s23, 1
      %p131 = por %p129, %p130
      %p132 = scmp.ne.s32.totalorder %s121, %s122
      %p133 = scmp.eq.s32.totalorder %s23, 0
      %p134 = por %p132, %p133
      %p135 = scmp.ne.s32.totalorder %s121, %s122
      %p136 = scmp.eq.s32.totalorder %s24, 1
      %p137 = por %p135, %p136
      %p139 = scmp.ne.s32.totalorder %s122, %s138
      %p140 = scmp.eq.s32.totalorder %s24, 0
      %p141 = por %p139, %p140
      %s143 = sadd.s32 %s142, 1
      %p146 = scmp.eq.s32.totalorder %s18, 1
      %p147 = scmp.ne.s32.totalorder %s142, %s144
      %p148 = scmp.eq.s32.totalorder %s18, 0
      %p149 = por %p147, %p148
      %p150 = scmp.ne.s32.totalorder %s142, %s144
      %p151 = scmp.eq.s32.totalorder %s23, 1
      %p152 = por %p150, %p151
      %p153 = scmp.ne.s32.totalorder %s144, %s145
      %p154 = scmp.eq.s32.totalorder %s23, 0
      %p155 = por %p153, %p154
      %p156 = scmp.ne.s32.totalorder %s144, %s145
      %p157 = scmp.eq.s32.totalorder %s24, 1
      %p158 = por %p156, %p157
      %p160 = scmp.ne.s32.totalorder %s145, %s159
      %p161 = scmp.eq.s32.totalorder %s24, 0
      %p162 = por %p160, %p161
      %s163 = ssub.s32 %s25, %s37
      %p164 = scmp.eq.s32.totalorder %s163, 0
      %s166 = sadd.s32 %s165, 1
      %s167 = scalar_select %p164, %s165, %s166
      %p170 = pneg %p164
      %p171 = scmp.eq.s32.totalorder %s18, 1
      %p172 = por %p170, %p171
      %p173 = scmp.ne.s32.totalorder %s165, %s168
      %p174 = scmp.eq.s32.totalorder %s18, 0
      %p175 = por %p173, %p174
      %p176 = scmp.ne.s32.totalorder %s165, %s168
      %p177 = scmp.eq.s32.totalorder %s23, 1
      %p178 = por %p176, %p177
      %p179 = scmp.ne.s32.totalorder %s168, %s169
      %p180 = scmp.eq.s32.totalorder %s23, 0
      %p181 = por %p179, %p180
      %p182 = scmp.ne.s32.totalorder %s168, %s169
      %p183 = scmp.eq.s32.totalorder %s24, 1
      %p184 = por %p182, %p183
      %p186 = scmp.ne.s32.totalorder %s169, %s185
      %p187 = scmp.eq.s32.totalorder %s24, 0
      %p188 = por %p186, %p187
      %p189 = scmp.le.s32.totalorder 1, %s18
      %p190 = scmp.lt.s32.totalorder %s18, 3
      %p191 = pnand %p189, %p190
      %p192 = pneg %p191
      // Predicated region
      $region9: #{tpu_custom_call.1} parent=5 // pred_check
        _
      $region10: #{tpu_custom_call.1} parent=5 // pred_check_branch
        %194 = sbr.rel (%p191) target = $region12
      $region11: #{tpu_custom_call.1} parent=5 // pred_region
        %s195 = ssub.s32 %s18, 1
        // Predicated region
        $region13: #{tpu_custom_call.1} parent=11 // pred_check
          %p196 = pneg %p82
        $region14: #{tpu_custom_call.1} parent=11 // pred_check_branch
          %198 = sbr.rel (%p196) target = $region16
        $region15: #{tpu_custom_call.1} parent=11 // pred_region
          %s199 = smul.u32 2, %s28
          %s201 = ssub.s32 4096, 4096
          %202 = vsyncadd [#allocation7], %s201
          %s203 = smul.addr %s199, 128
          %s204 = scalar_lea.hbm %s1, %s203
          %s205 = sshll.u32 [#allocation6], 4
          %s206 = int_to_ptr.vmem [resolvable:$true] %s205
          %211 = dma.hbm_to_vmem [thread:$0]  %s204, 4096, %s206, [#allocation7], 256, 256, 16
        $region16: #{tpu_custom_call.1} parent=11 // pred_fallthru
          _
        // Predicated region
        $region17: #{tpu_custom_call.1} parent=11 // pred_check
          %p212 = pneg %p108
        $region18: #{tpu_custom_call.1} parent=11 // pred_check_branch
          %214 = sbr.rel (%p212) target = $region20
        $region19: #{tpu_custom_call.1} parent=11 // pred_region
          %s215 = smul.u32 2, %s28
          %p216 = scmp.lt.s32.totalorder %s215, 1
          %s217 = scalar_select %p216, %s215, 1
          %s218 = scalar_lea.vmem %s2, %s217
          %s219 = smul.u32 2, %s28
        $region20: #{tpu_custom_call.1} parent=11 // pred_fallthru
          _
        // Predicated region
        $region21: #{tpu_custom_call.1} parent=11 // pred_check
          %p220 = pneg %p134
        $region22: #{tpu_custom_call.1} parent=11 // pred_check_branch
          %222 = sbr.rel (%p220) target = $region24
        $region23: #{tpu_custom_call.1} parent=11 // pred_region
          %s223 = smul.u32 32, %s28
          %s225 = ssub.s32 4096, 4096
          %226 = vsyncadd [#allocation7], %s225
          %s227 = smul.addr %s223, 128
          %s228 = scalar_lea.hbm %s3, %s227
          %s229 = sshll.u32 [#allocation8], 4
          %s230 = int_to_ptr.vmem [resolvable:$true] %s229
          %235 = dma.hbm_to_vmem [thread:$0]  %s228, 4096, %s230, [#allocation7], 128, 128, 8
        $region24: #{tpu_custom_call.1} parent=11 // pred_fallthru
          _
        // Predicated region
        $region25: #{tpu_custom_call.1} parent=11 // pred_check
          %p236 = pneg %p155
        $region26: #{tpu_custom_call.1} parent=11 // pred_check_branch
          %238 = sbr.rel (%p236) target = $region28
        $region27: #{tpu_custom_call.1} parent=11 // pred_region
          _
        $region28: #{tpu_custom_call.1} parent=11 // pred_fallthru
          _
      $region12: #{tpu_custom_call.1} parent=5 // pred_fallthru
        _
      %p239 = scmp.lt.s32.totalorder %s18, 2
      // Predicated region
      $region29: #{tpu_custom_call.1} parent=5 // pred_check
        %p240 = pneg %p239
      $region30: #{tpu_custom_call.1} parent=5 // pred_check_branch
        %242 = sbr.rel (%p240) target = $region32
      $region31: #{tpu_custom_call.1} parent=5 // pred_region
        // Predicated region
        $region33: #{tpu_custom_call.1} parent=31 // pred_check
          %p243 = pneg %p50
        $region34: #{tpu_custom_call.1} parent=31 // pred_check_branch
          %245 = sbr.rel (%p243) target = $region36
        $region35: #{tpu_custom_call.1} parent=31 // pred_region
          %s246 = sand.u32 %s40, 1
          %s247 = scalar_lea.sflag [#allocation4], %s246
          %s248 = sand.u32 %s40, 1
          %s249 = smul.addr %s248, 16
          %s250 = scalar_lea.vmem [#allocation3], %s249
          %s251 = smul.u32 2, %s25
          %s253 = ssub.s32 256, 256
          %254 = vsyncadd %s247, %s253
          %s255 = smul.addr %s251, 128
          %s256 = scalar_lea.hbm %s0, %s255
          %s257 = sshll.u32 %s250, 4
          %s258 = int_to_ptr.vmem [resolvable:$true] %s257
          %263 = dma.hbm_to_vmem [thread:$0]  %s256, 256, %s258, %s247, 128, 128, 8
        $region36: #{tpu_custom_call.1} parent=31 // pred_fallthru
          _
      $region32: #{tpu_custom_call.1} parent=5 // pred_fallthru
        _
      %p264 = scmp.le.s32.totalorder 1, %s18
      %p265 = scmp.lt.s32.totalorder %s18, 3
      %p266 = pnand %p264, %p265
      %p267 = pneg %p266
      // Predicated region
      $region37: #{tpu_custom_call.1} parent=5 // pred_check
        _
      $region38: #{tpu_custom_call.1} parent=5 // pred_check_branch
        %269 = sbr.rel (%p266) target = $region40
      $region39: #{tpu_custom_call.1} parent=5 // pred_region
        %s270 = ssub.s32 %s18, 1
        %s271 = sand.u32 %s43, 1
        %s272 = scalar_lea.sflag [#allocation4], %s271
        %s273 = sand.u32 %s43, 1
        %s274 = smul.addr %s273, 16
        %s275 = scalar_lea.vmem [#allocation3], %s274
        // Predicated region
        $region41: #{tpu_custom_call.1} parent=39 // pred_check
          %p276 = pneg %p56
        $region42: #{tpu_custom_call.1} parent=39 // pred_check_branch
          %278 = sbr.rel (%p276) target = $region44
        $region43: #{tpu_custom_call.1} parent=39 // pred_region
          %279 = dma.done %s272, 256
        $region44: #{tpu_custom_call.1} parent=39 // pred_fallthru
          _
        // Predicated region
        $region45: #{tpu_custom_call.1} parent=39 // pred_check
          %p280 = pneg %p82
        $region46: #{tpu_custom_call.1} parent=39 // pred_check_branch
          %282 = sbr.rel (%p280) target = $region48
        $region47: #{tpu_custom_call.1} parent=39 // pred_region
          %283 = dma.done [#allocation7], 4096
        $region48: #{tpu_custom_call.1} parent=39 // pred_fallthru
          _
        // Predicated region
        $region49: #{tpu_custom_call.1} parent=39 // pred_check
          %p284 = pneg %p134
        $region50: #{tpu_custom_call.1} parent=39 // pred_check_branch
          %286 = sbr.rel (%p284) target = $region52
        $region51: #{tpu_custom_call.1} parent=39 // pred_region
          %287 = dma.done [#allocation7], 4096
        $region52: #{tpu_custom_call.1} parent=39 // pred_fallthru
          _
        %s288 = sand.u32 %s43, 1
        %s289 = scalar_lea.sflag [#allocation4], %s288
        %s290 = sand.u32 %s43, 1
        %s291 = smul.addr %s290, 16
        %s292 = scalar_lea.vmem [#allocation3], %s291
        %p293 = pneg %p56
        %p294 = pneg %p53
        %p295 = pneg %p82
        %p296 = pneg %p79
        %s297 = smul.u32 2, %s28
        %p298 = scmp.lt.s32.totalorder %s297, 1
        %s299 = scalar_select %p298, %s297, 1
        %s300 = scalar_lea.vmem %s2, %s299
        %p301 = pneg %p108
        %p302 = pneg %p105
        %p303 = pneg %p134
        %p304 = pneg %p131
        %p305 = pneg %p155
        %p306 = pneg %p152
        %p307 = pneg %p181
        %p308 = pneg %p178
        %s309 = sand.u32 %s168, 1
        %s310 = scalar_lea.sflag [#allocation5], %s309
        %s311 = sand.u32 %s168, 1
        %s312 = smul.addr %s311, 16
        %s313 = scalar_lea.vmem [#allocation9], %s312
        %s314 = smul.u32 2, %s27
        %s315 = smul.u32 2, %s28
        %s316 = smul.u32 2, %s28
        %p317 = scmp.lt.s32.totalorder %s316, 1
        %s318 = scalar_select %p317, %s316, 1
        %s319 = scalar_lea.vmem %s2, %s318
        %s320 = smul.u32 2, %s28
        %s321 = smul.u32 32, %s28
        %s322 = smul.u32 2, %s27
        %p323 = scmp.eq.s32.totalorder %s28, 0
        // Predicated region
        $region53: #{tpu_custom_call.1} parent=39 // pred_check
          %p324 = pneg %p323
        $region54: #{tpu_custom_call.1} parent=39 // pred_check_branch
          %326 = sbr.rel (%p324) target = $region56
        $region55: #{tpu_custom_call.1} parent=39 // pred_region
          %327 = vst [vmem:[#allocation2] sm:$0xff] 0.0
          %328 = vst [vmem:[#allocation2 + $0x8] sm:$0xff] 0.0
        $region56: #{tpu_custom_call.1} parent=39 // pred_fallthru
          _
        %v329 = vld [vmem:[%s275] sm:$0xff]
        %v330 = vld [vmem:[%s275 + $0x8] sm:$0xff]
        %v331 = vld [vmem:[#allocation6] sm:$0xff]
        %v332 = vld [vmem:[#allocation6 + $0x8] sm:$0xff]
        %v333 = vld [vmem:[#allocation6 + $0x10] sm:$0xff]
        %v334 = vld [vmem:[#allocation6 + $0x18] sm:$0xff]
        %v335 = vld [vmem:[#allocation6 + $0x20] sm:$0xff]
        %v336 = vld [vmem:[#allocation6 + $0x28] sm:$0xff]
        %v337 = vld [vmem:[#allocation6 + $0x30] sm:$0xff]
        %v338 = vld [vmem:[#allocation6 + $0x38] sm:$0xff]
        %v339 = vld [vmem:[#allocation6 + $0x40] sm:$0xff]
        %v340 = vld [vmem:[#allocation6 + $0x48] sm:$0xff]
        %v341 = vld [vmem:[#allocation6 + $0x50] sm:$0xff]
        %v342 = vld [vmem:[#allocation6 + $0x58] sm:$0xff]
        %v343 = vld [vmem:[#allocation6 + $0x60] sm:$0xff]
        %v344 = vld [vmem:[#allocation6 + $0x68] sm:$0xff]
        %v345 = vld [vmem:[#allocation6 + $0x70] sm:$0xff]
        %v346 = vld [vmem:[#allocation6 + $0x78] sm:$0xff]
        %v347 = vld [vmem:[#allocation6 + $0x80] sm:$0xff]
        %v348 = vld [vmem:[#allocation6 + $0x88] sm:$0xff]
        %v349 = vld [vmem:[#allocation6 + $0x90] sm:$0xff]
        %v350 = vld [vmem:[#allocation6 + $0x98] sm:$0xff]
        %v351 = vld [vmem:[#allocation6 + $0xa0] sm:$0xff]
        %v352 = vld [vmem:[#allocation6 + $0xa8] sm:$0xff]
        %v353 = vld [vmem:[#allocation6 + $0xb0] sm:$0xff]
        %v354 = vld [vmem:[#allocation6 + $0xb8] sm:$0xff]
        %v355 = vld [vmem:[#allocation6 + $0xc0] sm:$0xff]
        %v356 = vld [vmem:[#allocation6 + $0xc8] sm:$0xff]
        %v357 = vld [vmem:[#allocation6 + $0xd0] sm:$0xff]
        %v358 = vld [vmem:[#allocation6 + $0xd8] sm:$0xff]
        %v359 = vld [vmem:[#allocation6 + $0xe0] sm:$0xff]
        %v360 = vld [vmem:[#allocation6 + $0xe8] sm:$0xff]
        %v361 = vld [vmem:[#allocation6 + $0xf0] sm:$0xff]
        %v362 = vld [vmem:[#allocation6 + $0xf8] sm:$0xff]
        %v363 = vld [vmem:[%s319] sm:$0x3]
        %v365 = vlaneseq
        %v366 = vshrl.u32 %v365, 7
        %v367 = vsub.s32 0, %v366
        %v368 = vrot.slane %v363, %v367
        %v369 = vlaneseq
        %v370 = vshrl.u32 %v369, 7
        %v371 = vsub.s32 1, %v370
        %v372 = vrot.slane %v363, %v371
        %375 = vmatprep.subr.mxu0 %v332
        %376 = vmatpush1.msra.mxu0 %v331
        %377 = vmatprep.subr.mxu0 %v334
        %378 = vmatpush1.msra.mxu0 %v333
        %379 = vmatprep.subr.mxu0 %v336
        %380 = vmatpush1.msra.mxu0 %v335
        %381 = vmatprep.subr.mxu0 %v338
        %382 = vmatpush1.msra.mxu0 %v337
        %383 = vmatprep.subr.mxu0 %v340
        %384 = vmatpush1.msra.mxu0 %v339
        %385 = vmatprep.subr.mxu0 %v342
        %386 = vmatpush1.msra.mxu0 %v341
        %387 = vmatprep.subr.mxu0 %v344
        %388 = vmatpush1.msra.mxu0 %v343
        %389 = vmatprep.subr.mxu0 %v346
        %390 = vmatpush1.msra.mxu0 %v345
        %391 = vmatprep.subr.mxu0 %v348
        %392 = vmatpush1.msra.mxu0 %v347
        %393 = vmatprep.subr.mxu0 %v350
        %394 = vmatpush1.msra.mxu0 %v349
        %395 = vmatprep.subr.mxu0 %v352
        %396 = vmatpush1.msra.mxu0 %v351
        %397 = vmatprep.subr.mxu0 %v354
        %398 = vmatpush1.msra.mxu0 %v353
        %399 = vmatprep.subr.mxu0 %v356
        %400 = vmatpush1.msra.mxu0 %v355
        %401 = vmatprep.subr.mxu0 %v358
        %402 = vmatpush1.msra.mxu0 %v357
        %403 = vmatprep.subr.mxu0 %v360
        %404 = vmatpush1.msra.mxu0 %v359
        %405 = vmatprep.subr.mxu0 %v362
        %406 = vmatpush1.msra.mxu0 %v361
        %407 = vmatprep.subr.mxu0 0.0
        %408 = vmatpush1.msra.mxu0 0.0
        %409 = vmatprep.subr.mxu0 0.0
        %410 = vmatpush1.msra.mxu0 0.0
        %411 = vmatprep.subr.mxu0 0.0
        %412 = vmatpush1.msra.mxu0 0.0
        %413 = vmatprep.subr.mxu0 0.0
        %414 = vmatpush1.msra.mxu0 0.0
        %415 = vmatprep.subr.mxu0 0.0
        %416 = vmatpush1.msra.mxu0 0.0
        %417 = vmatprep.subr.mxu0 0.0
        %418 = vmatpush1.msra.mxu0 0.0
        %419 = vmatprep.subr.mxu0 0.0
        %420 = vmatpush1.msra.mxu0 0.0
        %421 = vmatprep.subr.mxu0 0.0
        %422 = vmatpush1.msra.mxu0 0.0
        %423 = vmatprep.subr.mxu0 0.0
        %424 = vmatpush1.msra.mxu0 0.0
        %425 = vmatprep.subr.mxu0 0.0
        %426 = vmatpush1.msra.mxu0 0.0
        %427 = vmatprep.subr.mxu0 0.0
        %428 = vmatpush1.msra.mxu0 0.0
        %429 = vmatprep.subr.mxu0 0.0
        %430 = vmatpush1.msra.mxu0 0.0
        %431 = vmatprep.subr.mxu0 0.0
        %432 = vmatpush1.msra.mxu0 0.0
        %433 = vmatprep.subr.mxu0 0.0
        %434 = vmatpush1.msra.mxu0 0.0
        %435 = vmatprep.subr.mxu0 0.0
        %436 = vmatpush1.msra.mxu0 0.0
        %437 = vmatprep.subr.mxu0 0.0
        %438 = vmatpush1.msra.mxu0 0.0
        %439 = vmatprep.mubr.f32.mxu0 0.0
        %440 = vmatmul.mubr.f32.gmra.mrb[0].mxu0 %v329
        %v441 = vpop.f32.mrb[0].mxu0
        %v442 = vadd.f32 %v368, %v441
        %v443 = vpop.f32.mrb[0].mxu0
        %v444 = vadd.f32 %v372, %v443
        %445 = vmatprep.mubr.f32.mxu0 0.0
        %446 = vmatmul.mubr.f32.gmra.mrb[0].mxu0 %v330
        %v447 = vpop.f32.mrb[0].mxu0
        %v448 = vadd.f32 %v368, %v447
        %v449 = vpop.f32.mrb[0].mxu0
        %v450 = vadd.f32 %v372, %v449
        %451 = vdwg.mxu0
        %v452 = vmul.f32 %v442, 0.5
        %v453 = vmul.f32 %v444, 0.5
        %v454 = vmul.f32 %v448, 0.5
        %v455 = vmul.f32 %v450, 0.5
        %v456 = vmul.f32 %v442, 0.70710677
        %v457 = vmul.f32 %v444, 0.70710677
        %v458 = vmul.f32 %v448, 0.70710677
        %v459 = vmul.f32 %v450, 0.70710677
        %v460 = verf.f32.pop %v456
        %v461 = verf.f32.pop %v457
        %v462 = verf.f32.pop %v458
        %v463 = verf.f32.pop %v459
        %v464 = vadd.f32 %v460, 1.0
        %v465 = vadd.f32 %v461, 1.0
        %v466 = vadd.f32 %v462, 1.0
        %v467 = vadd.f32 %v463, 1.0
        %v468 = vmul.f32 %v452, %v464
        %v469 = vmul.f32 %v453, %v465
        %v470 = vmul.f32 %v454, %v466
        %v471 = vmul.f32 %v455, %v467
        %v472 = vld [vmem:[#allocation2] sm:$0xff]
        %v473 = vld [vmem:[#allocation2 + $0x8] sm:$0xff]
        %v474 = vld [vmem:[#allocation8] sm:$0xff]
        %v475 = vld [vmem:[#allocation8 + $0x8] sm:$0xff]
        %v476 = vld [vmem:[#allocation8 + $0x10] sm:$0xff]
        %v477 = vld [vmem:[#allocation8 + $0x18] sm:$0xff]
        %v478 = vld [vmem:[#allocation8 + $0x20] sm:$0xff]
        %v479 = vld [vmem:[#allocation8 + $0x28] sm:$0xff]
        %v480 = vld [vmem:[#allocation8 + $0x30] sm:$0xff]
        %v481 = vld [vmem:[#allocation8 + $0x38] sm:$0xff]
        %v482 = vld [vmem:[#allocation8 + $0x40] sm:$0xff]
        %v483 = vld [vmem:[#allocation8 + $0x48] sm:$0xff]
        %v484 = vld [vmem:[#allocation8 + $0x50] sm:$0xff]
        %v485 = vld [vmem:[#allocation8 + $0x58] sm:$0xff]
        %v486 = vld [vmem:[#allocation8 + $0x60] sm:$0xff]
        %v487 = vld [vmem:[#allocation8 + $0x68] sm:$0xff]
        %v488 = vld [vmem:[#allocation8 + $0x70] sm:$0xff]
        %v489 = vld [vmem:[#allocation8 + $0x78] sm:$0xff]
        %v490 = vld [vmem:[#allocation8 + $0x80] sm:$0xff]
        %v491 = vld [vmem:[#allocation8 + $0x88] sm:$0xff]
        %v492 = vld [vmem:[#allocation8 + $0x90] sm:$0xff]
        %v493 = vld [vmem:[#allocation8 + $0x98] sm:$0xff]
        %v494 = vld [vmem:[#allocation8 + $0xa0] sm:$0xff]
        %v495 = vld [vmem:[#allocation8 + $0xa8] sm:$0xff]
        %v496 = vld [vmem:[#allocation8 + $0xb0] sm:$0xff]
        %v497 = vld [vmem:[#allocation8 + $0xb8] sm:$0xff]
        %v498 = vld [vmem:[#allocation8 + $0xc0] sm:$0xff]
        %v499 = vld [vmem:[#allocation8 + $0xc8] sm:$0xff]
        %v500 = vld [vmem:[#allocation8 + $0xd0] sm:$0xff]
        %v501 = vld [vmem:[#allocation8 + $0xd8] sm:$0xff]
        %v502 = vld [vmem:[#allocation8 + $0xe0] sm:$0xff]
        %v503 = vld [vmem:[#allocation8 + $0xe8] sm:$0xff]
        %v504 = vld [vmem:[#allocation8 + $0xf0] sm:$0xff]
        %v505 = vld [vmem:[#allocation8 + $0xf8] sm:$0xff]
        %506 = vmatprep.subr.mxu0 0.0
        %507 = vmatpush1.msra.mxu0 %v474
        %508 = vmatprep.subr.mxu0 0.0
        %509 = vmatpush1.msra.mxu0 %v475
        %510 = vmatprep.subr.mxu0 0.0
        %511 = vmatpush1.msra.mxu0 %v476
        %512 = vmatprep.subr.mxu0 0.0
        %513 = vmatpush1.msra.mxu0 %v477
        %514 = vmatprep.subr.mxu0 0.0
        %515 = vmatpush1.msra.mxu0 %v478
        %516 = vmatprep.subr.mxu0 0.0
        %517 = vmatpush1.msra.mxu0 %v479
        %518 = vmatprep.subr.mxu0 0.0
        %519 = vmatpush1.msra.mxu0 %v480
        %520 = vmatprep.subr.mxu0 0.0
        %521 = vmatpush1.msra.mxu0 %v481
        %522 = vmatprep.subr.mxu0 0.0
        %523 = vmatpush1.msra.mxu0 %v482
        %524 = vmatprep.subr.mxu0 0.0
        %525 = vmatpush1.msra.mxu0 %v483
        %526 = vmatprep.subr.mxu0 0.0
        %527 = vmatpush1.msra.mxu0 %v484
        %528 = vmatprep.subr.mxu0 0.0
        %529 = vmatpush1.msra.mxu0 %v485
        %530 = vmatprep.subr.mxu0 0.0
        %531 = vmatpush1.msra.mxu0 %v486
        %532 = vmatprep.subr.mxu0 0.0
        %533 = vmatpush1.msra.mxu0 %v487
        %534 = vmatprep.subr.mxu0 0.0
        %535 = vmatpush1.msra.mxu0 %v488
        %536 = vmatprep.subr.mxu0 0.0
        %537 = vmatpush1.msra.mxu0 %v489
        %538 = vmatprep.subr.mxu0 0.0
        %539 = vmatpush1.msra.mxu0 %v490
        %540 = vmatprep.subr.mxu0 0.0
        %541 = vmatpush1.msra.mxu0 %v491
        %542 = vmatprep.subr.mxu0 0.0
        %543 = vmatpush1.msra.mxu0 %v492
        %544 = vmatprep.subr.mxu0 0.0
        %545 = vmatpush1.msra.mxu0 %v493
        %546 = vmatprep.subr.mxu0 0.0
        %547 = vmatpush1.msra.mxu0 %v494
        %548 = vmatprep.subr.mxu0 0.0
        %549 = vmatpush1.msra.mxu0 %v495
        %550 = vmatprep.subr.mxu0 0.0
        %551 = vmatpush1.msra.mxu0 %v496
        %552 = vmatprep.subr.mxu0 0.0
        %553 = vmatpush1.msra.mxu0 %v497
        %554 = vmatprep.subr.mxu0 0.0
        %555 = vmatpush1.msra.mxu0 %v498
        %556 = vmatprep.subr.mxu0 0.0
        %557 = vmatpush1.msra.mxu0 %v499
        %558 = vmatprep.subr.mxu0 0.0
        %559 = vmatpush1.msra.mxu0 %v500
        %560 = vmatprep.subr.mxu0 0.0
        %561 = vmatpush1.msra.mxu0 %v501
        %562 = vmatprep.subr.mxu0 0.0
        %563 = vmatpush1.msra.mxu0 %v502
        %564 = vmatprep.subr.mxu0 0.0
        %565 = vmatpush1.msra.mxu0 %v503
        %566 = vmatprep.subr.mxu0 0.0
        %567 = vmatpush1.msra.mxu0 %v504
        %568 = vmatprep.subr.mxu0 0.0
        %569 = vmatpush1.msra.mxu0 %v505
        %570 = vmatprep.mubr.f32.mxu0 %v469
        %571 = vmatmul.mubr.f32.gmra.mrb[0].mxu0 %v468
        %v572 = vpop.f32.mrb[0].mxu0
        %v573 = vadd.f32 0.0, %v572
        %v574 = vpop.f32.mrb[0].mxu0
        %575 = vmatprep.mubr.f32.mxu0 %v471
        %576 = vmatmul.mubr.f32.gmra.mrb[0].mxu0 %v470
        %v577 = vpop.f32.mrb[0].mxu0
        %v578 = vadd.f32 0.0, %v577
        %v579 = vpop.f32.mrb[0].mxu0
        %580 = vdwg.mxu0
        %v581 = vadd.f32 %v472, %v573
        %v582 = vadd.f32 %v473, %v578
        %583 = vst [vmem:[#allocation2] sm:$0xff] %v581
        %584 = vst [vmem:[#allocation2 + $0x8] sm:$0xff] %v582
        // Predicated region
        $region57: #{tpu_custom_call.1} parent=39 // pred_check
          %p585 = pneg %p323
        $region58: #{tpu_custom_call.1} parent=39 // pred_check_branch
          %587 = sbr.rel (%p585) target = $region60
        $region59: #{tpu_custom_call.1} parent=39 // pred_region
          %v588 = vld [vmem:[%s4] sm:$0x7]
          %v589 = vld [vmem:[#allocation2] sm:$0xff]
          %v590 = vld [vmem:[#allocation2 + $0x8] sm:$0xff]
          %v591 = vlaneseq
          %v592 = vshrl.u32 %v591, 7
          %v593 = vsub.s32 0, %v592
          %v594 = vrot.slane %v588, %v593
          %v595 = vadd.f32 %v589, %v594
          %v596 = vadd.f32 %v590, %v594
          %597 = vadd.xlane.f32.xlu0 %v595
          %v598 = vpop.xlane.xlu0 %597
          %599 = vadd.xlane.f32.xlu0 %v596
          %v600 = vpop.xlane.xlu0 %599
          %v601 = vrcp.pop 128.0
          %v602 = vmul.f32 %v598, %v601
          %v603 = vmul.f32 %v600, %v601
          %v604 = vsub.f32 %v595, %v602
          %v605 = vsub.f32 %v596, %v603
          %v606 = vmul.f32 %v604, %v604
          %v607 = vmul.f32 %v605, %v605
          %608 = vadd.xlane.f32.xlu0 %v606
          %v609 = vpop.xlane.xlu0 %608
          %610 = vadd.xlane.f32.xlu0 %v607
          %v611 = vpop.xlane.xlu0 %610
          %v612 = vmul.f32 %v609, %v601
          %v613 = vmul.f32 %v611, %v601
          %v614 = vadd.f32 %v612, 1e-05
          %v615 = vadd.f32 %v613, 1e-05
          %v616 = vrsqrt.pop %v614
          %v617 = vrsqrt.pop %v615
          %v618 = vmul.f32 %v604, %v616
          %v619 = vmul.f32 %v605, %v617
          %v620 = vlaneseq
          %v621 = vshrl.u32 %v620, 7
          %v622 = vsub.s32 1, %v621
          %v623 = vrot.slane %v588, %v622
          %v624 = vmul.f32 %v618, %v623
          %v625 = vmul.f32 %v619, %v623
          %v626 = vlaneseq
          %v627 = vshrl.u32 %v626, 7
          %v628 = vsub.s32 2, %v627
          %v629 = vrot.slane %v588, %v628
          %v630 = vadd.f32 %v624, %v629
          %v631 = vadd.f32 %v625, %v629
          %632 = vst [vmem:[%s313] sm:$0xff] %v630
          %633 = vst [vmem:[%s313 + $0x8] sm:$0xff] %v631
        $region60: #{tpu_custom_call.1} parent=39 // pred_fallthru
          _
        %s634 = sand.u32 %s168, 1
        %s635 = scalar_lea.sflag [#allocation5], %s634
        %s636 = sand.u32 %s168, 1
        %s637 = smul.addr %s636, 16
        %s638 = scalar_lea.vmem [#allocation9], %s637
        // Predicated region
        $region61: #{tpu_custom_call.1} parent=39 // pred_check
          %p639 = pneg %p178
        $region62: #{tpu_custom_call.1} parent=39 // pred_check_branch
          %641 = sbr.rel (%p639) target = $region64
        $region63: #{tpu_custom_call.1} parent=39 // pred_region
          %s642 = smul.u32 2, %s27
          %s644 = ssub.s32 256, 256
          %645 = vsyncadd %s635, %s644
          %s646 = smul.addr %s642, 128
          %s647 = scalar_lea.hbm %s5, %s646
          %s648 = sshll.u32 %s638, 4
          %s649 = int_to_ptr.vmem [resolvable:$true] %s648
          %654 = dma.vmem_to_hbm [thread:$0]  %s649, 256, %s647, %s635, 128, 128, 8
        $region64: #{tpu_custom_call.1} parent=39 // pred_fallthru
          _
      $region40: #{tpu_custom_call.1} parent=5 // pred_fallthru
        _
      %p655 = scmp.le.s32.totalorder 2, %s18
      // Predicated region
      $region65: #{tpu_custom_call.1} parent=5 // pred_check
        %p656 = pneg %p655
      $region66: #{tpu_custom_call.1} parent=5 // pred_check_branch
        %658 = sbr.rel (%p656) target = $region68
      $region67: #{tpu_custom_call.1} parent=5 // pred_region
        %s659 = ssub.s32 %s18, 2
        // Predicated region
        $region69: #{tpu_custom_call.1} parent=67 // pred_check
          %p660 = pneg %p184
        $region70: #{tpu_custom_call.1} parent=67 // pred_check_branch
          %662 = sbr.rel (%p660) target = $region72
        $region71: #{tpu_custom_call.1} parent=67 // pred_region
          %s663 = sand.u32 %s169, 1
          %s664 = scalar_lea.sflag [#allocation5], %s663
          %s665 = sand.u32 %s169, 1
          %s666 = smul.addr %s665, 16
          %s667 = scalar_lea.vmem [#allocation9], %s666
          %668 = dma.done %s664, 256
        $region72: #{tpu_custom_call.1} parent=67 // pred_fallthru
          _
      $region68: #{tpu_custom_call.1} parent=5 // pred_fallthru
        _
    $region6: #{tpu_custom_call.1} parent=1 // loop_footer
      %s22 = sadd.s32 1, %s18
    $region7: #{tpu_custom_call.1} parent=1 // loop_footer_branch
      %17 = sbr.rel target = $region3
    $region8: #{tpu_custom_call.1} parent=1 // loop_exit
      _
    %669 = vsyncpa [#allocation4], 1
    %s670 = scalar_lea.sflag [#allocation4], 1
    %671 = vsyncpa %s670, 1
    %672 = vsyncpa [#allocation7], 1
    %673 = vsyncpa [#allocation5], 1
    %s674 = scalar_lea.sflag [#allocation5], 1
    %675 = vsyncpa %s674, 1

// kernel: tpu_custom_call.1
$region0: #{tpu_custom_call.1}
  #allocation0 [shape = 'u32[]', space=smem, size = 0x4, offset = 0x4, fixed_abs, tag = 'smem constant byte address 0x4 - core index']
  #allocation1 [shape = 'u32[144,128]{1,0:T(1,128)}', space=vmem, size = 0x12000, scoped, tag = 'internal scratch']
  #allocation2 [shape = 'f32[16,128]{1,0:T(8,128)}', space=vmem, size = 0x2000, scoped, tag = 'scratch operand']
  %s0 = inlined_call_operand.hbm [shape: f32[32,128], index: 0, kind: input, shape index: {}]
  %s1 = inlined_call_operand.hbm [shape: f32[128,256], index: 1, kind: input, shape index: {}]
  %s2 = inlined_call_operand.vmem [shape: f32[1,256], index: 2, kind: input, shape index: {}]
  %s3 = inlined_call_operand.hbm [shape: f32[256,128], index: 3, kind: input, shape index: {}]
  %s4 = inlined_call_operand.vmem [shape: f32[3,128], index: 4, kind: input, shape index: {}]
  %s5 = inlined_call_operand.hbm [shape: f32[32,128], index: 5, kind: output, shape index: {}]
  %s6 = sld [smem:[#allocation0]]
  $region73: #{tpu_custom_call.1} parent=0
    _
  %s8 = ssub.s32 1, %s6
  %s9 = scalar_select 0, %s8, %s6
  $region1: #{tpu_custom_call.1} parent=0
    #allocation3 [shape = 'u8[16384]{0}', space=vmem, size = 0x4000, scoped, tag = 'input window, operand 0']
    #allocation4 [shape = 's32[2]{0}', space=sflag, size = 0x8, scoped, tag = 'scoped memory for tpu_custom_call.1']
    #allocation5 [shape = 's32[2]{0}', space=sflag, size = 0x8, scoped, tag = 'scoped memory for tpu_custom_call.1']
    #allocation6 [shape = 'u8[131072]{0}', space=vmem, size = 0x20000, scoped, tag = 'input window, operand 1, single buffered']
    #allocation7 [shape = 's32[1]{0}', space=sflag, size = 0x4, scoped, tag = 'scoped memory for tpu_custom_call.1']
    #allocation8 [shape = 'u8[131072]{0}', space=vmem, size = 0x20000, scoped, tag = 'input window, operand 3, single buffered']
    #allocation9 [shape = 'u8[16384]{0}', space=vmem, size = 0x4000, scoped, tag = 'output window, operand 0']
    %10 = vsyncpa [#allocation4], 0
    %s11 = scalar_lea.sflag [#allocation4], 1
    %12 = vsyncpa %s11, 0
    %13 = vsyncpa [#allocation7], 0
    %14 = vsyncpa [#allocation5], 0
    %s15 = scalar_lea.sflag [#allocation5], 1
    %16 = vsyncpa %s15, 0
    loop: start=0, step=1, limit=4
    $region2: #{tpu_custom_call.1} parent=1 // loop_pre_header
      _
    $region3: #{tpu_custom_call.1} parent=1 // loop_header
      %s18 = sphi 0, %s22
      %p19 = scmp.ge.s32.totalorder %s18, 4
      %s25 = sphi 0, %s37
      %s26 = sphi 0, %s33
      %s27 = sphi 0, %s25
      %s28 = sphi 0, %s26
      %s29 = sphi 0, %s27
      %s30 = sphi 0, %s28
      %s40 = sphi 0, %s42
      %s43 = sphi 0, %s40
      %s44 = sphi 0, %s43
      %s60 = sphi 0, %s44
      %s66 = sphi 0, %s68
      %s69 = sphi 0, %s66
      %s70 = sphi 0, %s69
      %s86 = sphi 0, %s70
      %s92 = sphi 0, %s94
      %s95 = sphi 0, %s92
      %s96 = sphi 0, %s95
      %s112 = sphi 0, %s96
      %s118 = sphi 0, %s120
      %s121 = sphi 0, %s118
      %s122 = sphi 0, %s121
      %s138 = sphi 0, %s122
      %s142 = sphi 0, %s142
      %s144 = sphi 0, %s142
      %s145 = sphi 0, %s144
      %s159 = sphi 0, %s145
      %s165 = sphi 0, %s167
      %s168 = sphi 0, %s165
      %s169 = sphi 0, %s168
      %s185 = sphi 0, %s169
    $region4: #{tpu_custom_call.1} parent=1 // loop_header_branch
      %21 = sbr.rel (%p19) target = $region8
    $region5: #{tpu_custom_call.1} parent=1 // loop_body
      %s23 = ssub.s32 %s18, 1
      %s24 = ssub.s32 %s18, 2
      %s31 = sadd.s32 1, %s26
      %p32 = scmp.ge.s32.totalorder %s31, 1
      %s33 = scalar_select %p32, 0, %s31
      %s34 = sadd.s32 1, %s25
      %s35 = scalar_select %p32, %s34, %s25
      %p36 = scmp.ge.s32.totalorder %s35, 2
      %s37 = scalar_select %p36, 0, %s35
      %s38 = ssub.s32 %s25, %s37
      %p39 = scmp.eq.s32.totalorder %s38, 0
      %s41 = sadd.s32 %s40, 1
      %s42 = scalar_select %p39, %s40, %s41
      %p45 = pneg %p39
      %p46 = scmp.eq.s32.totalorder %s18, 1
      %p47 = por %p45, %p46
      %p48 = scmp.ne.s32.totalorder %s40, %s43
      %p49 = scmp.eq.s32.totalorder %s18, 0
      %p50 = por %p48, %p49
      %p51 = scmp.ne.s32.totalorder %s40, %s43
      %p52 = scmp.eq.s32.totalorder %s23, 1
      %p53 = por %p51, %p52
      %p54 = scmp.ne.s32.totalorder %s43, %s44
      %p55 = scmp.eq.s32.totalorder %s23, 0
      %p56 = por %p54, %p55
      %p57 = scmp.ne.s32.totalorder %s43, %s44
      %p58 = scmp.eq.s32.totalorder %s24, 1
      %p59 = por %p57, %p58
      %p61 = scmp.ne.s32.totalorder %s44, %s60
      %p62 = scmp.eq.s32.totalorder %s24, 0
      %p63 = por %p61, %p62
      %s64 = ssub.s32 %s26, %s33
      %p65 = scmp.eq.s32.totalorder %s64, 0
      %s67 = sadd.s32 %s66, 1
      %s68 = scalar_select %p65, %s66, %s67
      %p71 = pneg %p65
      %p72 = scmp.eq.s32.totalorder %s18, 1
      %p73 = por %p71, %p72
      %p74 = scmp.ne.s32.totalorder %s66, %s69
      %p75 = scmp.eq.s32.totalorder %s18, 0
      %p76 = por %p74, %p75
      %p77 = scmp.ne.s32.totalorder %s66, %s69
      %p78 = scmp.eq.s32.totalorder %s23, 1
      %p79 = por %p77, %p78
      %p80 = scmp.ne.s32.totalorder %s69, %s70
      %p81 = scmp.eq.s32.totalorder %s23, 0
      %p82 = por %p80, %p81
      %p83 = scmp.ne.s32.totalorder %s69, %s70
      %p84 = scmp.eq.s32.totalorder %s24, 1
      %p85 = por %p83, %p84
      %p87 = scmp.ne.s32.totalorder %s70, %s86
      %p88 = scmp.eq.s32.totalorder %s24, 0
      %p89 = por %p87, %p88
      %s90 = ssub.s32 %s26, %s33
      %p91 = scmp.eq.s32.totalorder %s90, 0
      %s93 = sadd.s32 %s92, 1
      %s94 = scalar_select %p91, %s92, %s93
      %p97 = pneg %p91
      %p98 = scmp.eq.s32.totalorder %s18, 1
      %p99 = por %p97, %p98
      %p100 = scmp.ne.s32.totalorder %s92, %s95
      %p101 = scmp.eq.s32.totalorder %s18, 0
      %p102 = por %p100, %p101
      %p103 = scmp.ne.s32.totalorder %s92, %s95
      %p104 = scmp.eq.s32.totalorder %s23, 1
      %p105 = por %p103, %p104
      %p106 = scmp.ne.s32.totalorder %s95, %s96
      %p107 = scmp.eq.s32.totalorder %s23, 0
      %p108 = por %p106, %p107
      %p109 = scmp.ne.s32.totalorder %s95, %s96
      %p110 = scmp.eq.s32.totalorder %s24, 1
      %p111 = por %p109, %p110
      %p113 = scmp.ne.s32.totalorder %s96, %s112
      %p114 = scmp.eq.s32.totalorder %s24, 0
      %p115 = por %p113, %p114
      %s116 = ssub.s32 %s26, %s33
      %p117 = scmp.eq.s32.totalorder %s116, 0
      %s119 = sadd.s32 %s118, 1
      %s120 = scalar_select %p117, %s118, %s119
      %p123 = pneg %p117
      %p124 = scmp.eq.s32.totalorder %s18, 1
      %p125 = por %p123, %p124
      %p126 = scmp.ne.s32.totalorder %s118, %s121
      %p127 = scmp.eq.s32.totalorder %s18, 0
      %p128 = por %p126, %p127
      %p129 = scmp.ne.s32.totalorder %s118, %s121
      %p130 = scmp.eq.s32.totalorder %s23, 1
      %p131 = por %p129, %p130
      %p132 = scmp.ne.s32.totalorder %s121, %s122
      %p133 = scmp.eq.s32.totalorder %s23, 0
      %p134 = por %p132, %p133
      %p135 = scmp.ne.s32.totalorder %s121, %s122
      %p136 = scmp.eq.s32.totalorder %s24, 1
      %p137 = por %p135, %p136
      %p139 = scmp.ne.s32.totalorder %s122, %s138
      %p140 = scmp.eq.s32.totalorder %s24, 0
      %p141 = por %p139, %p140
      %s143 = sadd.s32 %s142, 1
      %p146 = scmp.eq.s32.totalorder %s18, 1
      %p147 = scmp.ne.s32.totalorder %s142, %s144
      %p148 = scmp.eq.s32.totalorder %s18, 0
      %p149 = por %p147, %p148
      %p150 = scmp.ne.s32.totalorder %s142, %s144
      %p151 = scmp.eq.s32.totalorder %s23, 1
      %p152 = por %p150, %p151
      %p153 = scmp.ne.s32.totalorder %s144, %s145
      %p154 = scmp.eq.s32.totalorder %s23, 0
      %p155 = por %p153, %p154
      %p156 = scmp.ne.s32.totalorder %s144, %s145
      %p157 = scmp.eq.s32.totalorder %s24, 1
      %p158 = por %p156, %p157
      %p160 = scmp.ne.s32.totalorder %s145, %s159
      %p161 = scmp.eq.s32.totalorder %s24, 0
      %p162 = por %p160, %p161
      %s163 = ssub.s32 %s25, %s37
      %p164 = scmp.eq.s32.totalorder %s163, 0
      %s166 = sadd.s32 %s165, 1
      %s167 = scalar_select %p164, %s165, %s166
      %p170 = pneg %p164
      %p171 = scmp.eq.s32.totalorder %s18, 1
      %p172 = por %p170, %p171
      %p173 = scmp.ne.s32.totalorder %s165, %s168
      %p174 = scmp.eq.s32.totalorder %s18, 0
      %p175 = por %p173, %p174
      %p176 = scmp.ne.s32.totalorder %s165, %s168
      %p177 = scmp.eq.s32.totalorder %s23, 1
      %p178 = por %p176, %p177
      %p179 = scmp.ne.s32.totalorder %s168, %s169
      %p180 = scmp.eq.s32.totalorder %s23, 0
      %p181 = por %p179, %p180
      %p182 = scmp.ne.s32.totalorder %s168, %s169
      %p183 = scmp.eq.s32.totalorder %s24, 1
      %p184 = por %p182, %p183
      %p186 = scmp.ne.s32.totalorder %s169, %s185
      %p187 = scmp.eq.s32.totalorder %s24, 0
      %p188 = por %p186, %p187
      %p189 = scmp.le.s32.totalorder 1, %s18
      %p190 = scmp.lt.s32.totalorder %s18, 3
      %p191 = pnand %p189, %p190
      %p192 = pneg %p191
      // Predicated region
      $region9: #{tpu_custom_call.1} parent=5 // pred_check
        _
      $region10: #{tpu_custom_call.1} parent=5 // pred_check_branch
        %194 = sbr.rel (%p191) target = $region12
      $region11: #{tpu_custom_call.1} parent=5 // pred_region
        %s195 = ssub.s32 %s18, 1
        // Predicated region
        $region13: #{tpu_custom_call.1} parent=11 // pred_check
          %p196 = pneg %p82
        $region14: #{tpu_custom_call.1} parent=11 // pred_check_branch
          %198 = sbr.rel (%p196) target = $region16
        $region15: #{tpu_custom_call.1} parent=11 // pred_region
          %s199 = smul.u32 2, %s28
          %s201 = ssub.s32 4096, 4096
          %202 = vsyncadd [#allocation7], %s201
          %s203 = smul.addr %s199, 128
          %s204 = scalar_lea.hbm %s1, %s203
          %s205 = sshll.u32 [#allocation6], 4
          %s206 = int_to_ptr.vmem [resolvable:$true] %s205
          %211 = dma.hbm_to_vmem [thread:$0]  %s204, 4096, %s206, [#allocation7], 256, 256, 16
        $region16: #{tpu_custom_call.1} parent=11 // pred_fallthru
          _
        // Predicated region
        $region17: #{tpu_custom_call.1} parent=11 // pred_check
          %p212 = pneg %p108
        $region18: #{tpu_custom_call.1} parent=11 // pred_check_branch
          %214 = sbr.rel (%p212) target = $region20
        $region19: #{tpu_custom_call.1} parent=11 // pred_region
          %s215 = smul.u32 2, %s28
          %p216 = scmp.lt.s32.totalorder %s215, 1
          %s217 = scalar_select %p216, %s215, 1
          %s218 = scalar_lea.vmem %s2, %s217
          %s219 = smul.u32 2, %s28
        $region20: #{tpu_custom_call.1} parent=11 // pred_fallthru
          _
        // Predicated region
        $region21: #{tpu_custom_call.1} parent=11 // pred_check
          %p220 = pneg %p134
        $region22: #{tpu_custom_call.1} parent=11 // pred_check_branch
          %222 = sbr.rel (%p220) target = $region24
        $region23: #{tpu_custom_call.1} parent=11 // pred_region
          %s223 = smul.u32 32, %s28
          %s225 = ssub.s32 4096, 4096
          %226 = vsyncadd [#allocation7], %s225
          %s227 = smul.addr %s223, 128
          %s228 = scalar_lea.hbm %s3, %s227
          %s229 = sshll.u32 [#allocation8], 4
          %s230 = int_to_ptr.vmem [resolvable:$true] %s229
          %235 = dma.hbm_to_vmem [thread:$0]  %s228, 4096, %s230, [#allocation7], 128, 128, 8
        $region24: #{tpu_custom_call.1} parent=11 // pred_fallthru
          _
        // Predicated region
        $region25: #{tpu_custom_call.1} parent=11 // pred_check
          %p236 = pneg %p155
        $region26: #{tpu_custom_call.1} parent=11 // pred_check_branch
          %238 = sbr.rel (%p236) target = $region28
        $region27: #{tpu_custom_call.1} parent=11 // pred_region
          _
        $region28: #{tpu_custom_call.1} parent=11 // pred_fallthru
          _
      $region12: #{tpu_custom_call.1} parent=5 // pred_fallthru
        _
      %p239 = scmp.lt.s32.totalorder %s18, 2
      // Predicated region
      $region29: #{tpu_custom_call.1} parent=5 // pred_check
        %p240 = pneg %p239
      $region30: #{tpu_custom_call.1} parent=5 // pred_check_branch
        %242 = sbr.rel (%p240) target = $region32
      $region31: #{tpu_custom_call.1} parent=5 // pred_region
        // Predicated region
        $region33: #{tpu_custom_call.1} parent=31 // pred_check
          %p243 = pneg %p50
        $region34: #{tpu_custom_call.1} parent=31 // pred_check_branch
          %245 = sbr.rel (%p243) target = $region36
        $region35: #{tpu_custom_call.1} parent=31 // pred_region
          %s246 = sand.u32 %s40, 1
          %s247 = scalar_lea.sflag [#allocation4], %s246
          %s248 = sand.u32 %s40, 1
          %s249 = smul.addr %s248, 16
          %s250 = scalar_lea.vmem [#allocation3], %s249
          %s251 = smul.u32 2, %s25
          %s253 = ssub.s32 256, 256
          %254 = vsyncadd %s247, %s253
          %s255 = smul.addr %s251, 128
          %s256 = scalar_lea.hbm %s0, %s255
          %s257 = sshll.u32 %s250, 4
          %s258 = int_to_ptr.vmem [resolvable:$true] %s257
          %263 = dma.hbm_to_vmem [thread:$0]  %s256, 256, %s258, %s247, 128, 128, 8
        $region36: #{tpu_custom_call.1} parent=31 // pred_fallthru
          _
      $region32: #{tpu_custom_call.1} parent=5 // pred_fallthru
        _
      %p264 = scmp.le.s32.totalorder 1, %s18
      %p265 = scmp.lt.s32.totalorder %s18, 3
      %p266 = pnand %p264, %p265
      %p267 = pneg %p266
      // Predicated region
      $region37: #{tpu_custom_call.1} parent=5 // pred_check
        _
      $region38: #{tpu_custom_call.1} parent=5 // pred_check_branch
        %269 = sbr.rel (%p266) target = $region40
      $region39: #{tpu_custom_call.1} parent=5 // pred_region
        %s270 = ssub.s32 %s18, 1
        %s271 = sand.u32 %s43, 1
        %s272 = scalar_lea.sflag [#allocation4], %s271
        %s273 = sand.u32 %s43, 1
        %s274 = smul.addr %s273, 16
        %s275 = scalar_lea.vmem [#allocation3], %s274
        // Predicated region
        $region41: #{tpu_custom_call.1} parent=39 // pred_check
          %p276 = pneg %p56
        $region42: #{tpu_custom_call.1} parent=39 // pred_check_branch
          %278 = sbr.rel (%p276) target = $region44
        $region43: #{tpu_custom_call.1} parent=39 // pred_region
          %279 = dma.done %s272, 256
        $region44: #{tpu_custom_call.1} parent=39 // pred_fallthru
          _
        // Predicated region
        $region45: #{tpu_custom_call.1} parent=39 // pred_check
          %p280 = pneg %p82
        $region46: #{tpu_custom_call.1} parent=39 // pred_check_branch
          %282 = sbr.rel (%p280) target = $region48
        $region47: #{tpu_custom_call.1} parent=39 // pred_region
          %283 = dma.done [#allocation7], 4096
        $region48: #{tpu_custom_call.1} parent=39 // pred_fallthru
          _
        // Predicated region
        $region49: #{tpu_custom_call.1} parent=39 // pred_check
          %p284 = pneg %p134
        $region50: #{tpu_custom_call.1} parent=39 // pred_check_branch
          %286 = sbr.rel (%p284) target = $region52
        $region51: #{tpu_custom_call.1} parent=39 // pred_region
          %287 = dma.done [#allocation7], 4096
        $region52: #{tpu_custom_call.1} parent=39 // pred_fallthru
          _
        %s288 = sand.u32 %s43, 1
        %s289 = scalar_lea.sflag [#allocation4], %s288
        %s290 = sand.u32 %s43, 1
        %s291 = smul.addr %s290, 16
        %s292 = scalar_lea.vmem [#allocation3], %s291
        %p293 = pneg %p56
        %p294 = pneg %p53
        %p295 = pneg %p82
        %p296 = pneg %p79
        %s297 = smul.u32 2, %s28
        %p298 = scmp.lt.s32.totalorder %s297, 1
        %s299 = scalar_select %p298, %s297, 1
        %s300 = scalar_lea.vmem %s2, %s299
        %p301 = pneg %p108
        %p302 = pneg %p105
        %p303 = pneg %p134
        %p304 = pneg %p131
        %p305 = pneg %p155
        %p306 = pneg %p152
        %p307 = pneg %p181
        %p308 = pneg %p178
        %s309 = sand.u32 %s168, 1
        %s310 = scalar_lea.sflag [#allocation5], %s309
        %s311 = sand.u32 %s168, 1
        %s312 = smul.addr %s311, 16
        %s313 = scalar_lea.vmem [#allocation9], %s312
        %s314 = smul.u32 2, %s27
        %s315 = smul.u32 2, %s28
        %s316 = smul.u32 2, %s28
        %p317 = scmp.lt.s32.totalorder %s316, 1
        %s318 = scalar_select %p317, %s316, 1
        %s319 = scalar_lea.vmem %s2, %s318
        %s320 = smul.u32 2, %s28
        %s321 = smul.u32 32, %s28
        %s322 = smul.u32 2, %s27
        %p323 = scmp.eq.s32.totalorder %s28, 0
        // Predicated region
        $region53: #{tpu_custom_call.1} parent=39 // pred_check
          %p324 = pneg %p323
        $region54: #{tpu_custom_call.1} parent=39 // pred_check_branch
          %326 = sbr.rel (%p324) target = $region56
        $region55: #{tpu_custom_call.1} parent=39 // pred_region
          %327 = vst [vmem:[#allocation2] sm:$0xff] 0.0
          %328 = vst [vmem:[#allocation2 + $0x8] sm:$0xff] 0.0
        $region56: #{tpu_custom_call.1} parent=39 // pred_fallthru
          _
        %v329 = vld [vmem:[%s275] sm:$0xff]
        %v330 = vld [vmem:[%s275 + $0x8] sm:$0xff]
        %v331 = vld [vmem:[#allocation6] sm:$0xff]
        %v332 = vld [vmem:[#allocation6 + $0x8] sm:$0xff]
        %v333 = vld [vmem:[#allocation6 + $0x10] sm:$0xff]
        %v334 = vld [vmem:[#allocation6 + $0x18] sm:$0xff]
        %v335 = vld [vmem:[#allocation6 + $0x20] sm:$0xff]
        %v336 = vld [vmem:[#allocation6 + $0x28] sm:$0xff]
        %v337 = vld [vmem:[#allocation6 + $0x30] sm:$0xff]
        %v338 = vld [vmem:[#allocation6 + $0x38] sm:$0xff]
        %v339 = vld [vmem:[#allocation6 + $0x40] sm:$0xff]
        %v340 = vld [vmem:[#allocation6 + $0x48] sm:$0xff]
        %v341 = vld [vmem:[#allocation6 + $0x50] sm:$0xff]
        %v342 = vld [vmem:[#allocation6 + $0x58] sm:$0xff]
        %v343 = vld [vmem:[#allocation6 + $0x60] sm:$0xff]
        %v344 = vld [vmem:[#allocation6 + $0x68] sm:$0xff]
        %v345 = vld [vmem:[#allocation6 + $0x70] sm:$0xff]
        %v346 = vld [vmem:[#allocation6 + $0x78] sm:$0xff]
        %v347 = vld [vmem:[#allocation6 + $0x80] sm:$0xff]
        %v348 = vld [vmem:[#allocation6 + $0x88] sm:$0xff]
        %v349 = vld [vmem:[#allocation6 + $0x90] sm:$0xff]
        %v350 = vld [vmem:[#allocation6 + $0x98] sm:$0xff]
        %v351 = vld [vmem:[#allocation6 + $0xa0] sm:$0xff]
        %v352 = vld [vmem:[#allocation6 + $0xa8] sm:$0xff]
        %v353 = vld [vmem:[#allocation6 + $0xb0] sm:$0xff]
        %v354 = vld [vmem:[#allocation6 + $0xb8] sm:$0xff]
        %v355 = vld [vmem:[#allocation6 + $0xc0] sm:$0xff]
        %v356 = vld [vmem:[#allocation6 + $0xc8] sm:$0xff]
        %v357 = vld [vmem:[#allocation6 + $0xd0] sm:$0xff]
        %v358 = vld [vmem:[#allocation6 + $0xd8] sm:$0xff]
        %v359 = vld [vmem:[#allocation6 + $0xe0] sm:$0xff]
        %v360 = vld [vmem:[#allocation6 + $0xe8] sm:$0xff]
        %v361 = vld [vmem:[#allocation6 + $0xf0] sm:$0xff]
        %v362 = vld [vmem:[#allocation6 + $0xf8] sm:$0xff]
        %v363 = vld [vmem:[%s319] sm:$0x3]
        %v365 = vlaneseq
        %v366 = vshrl.u32 %v365, 7
        %v367 = vsub.s32 0, %v366
        %v368 = vrot.slane %v363, %v367
        %v369 = vlaneseq
        %v370 = vshrl.u32 %v369, 7
        %v371 = vsub.s32 1, %v370
        %v372 = vrot.slane %v363, %v371
        %375 = vmatprep.subr.mxu0 %v332
        %376 = vmatpush1.msra.mxu0 %v331
        %377 = vmatprep.subr.mxu0 %v334
        %378 = vmatpush1.msra.mxu0 %v333
        %379 = vmatprep.subr.mxu0 %v336
        %380 = vmatpush1.msra.mxu0 %v335
        %381 = vmatprep.subr.mxu0 %v338
        %382 = vmatpush1.msra.mxu0 %v337
        %383 = vmatprep.subr.mxu0 %v340
        %384 = vmatpush1.msra.mxu0 %v339
        %385 = vmatprep.subr.mxu0 %v342
        %386 = vmatpush1.msra.mxu0 %v341
        %387 = vmatprep.subr.mxu0 %v344
        %388 = vmatpush1.msra.mxu0 %v343
        %389 = vmatprep.subr.mxu0 %v346
        %390 = vmatpush1.msra.mxu0 %v345
        %391 = vmatprep.subr.mxu0 %v348
        %392 = vmatpush1.msra.mxu0 %v347
        %393 = vmatprep.subr.mxu0 %v350
        %394 = vmatpush1.msra.mxu0 %v349
        %395 = vmatprep.subr.mxu0 %v352
        %396 = vmatpush1.msra.mxu0 %v351
        %397 = vmatprep.subr.mxu0 %v354
        %398 = vmatpush1.msra.mxu0 %v353
        %399 = vmatprep.subr.mxu0 %v356
        %400 = vmatpush1.msra.mxu0 %v355
        %401 = vmatprep.subr.mxu0 %v358
        %402 = vmatpush1.msra.mxu0 %v357
        %403 = vmatprep.subr.mxu0 %v360
        %404 = vmatpush1.msra.mxu0 %v359
        %405 = vmatprep.subr.mxu0 %v362
        %406 = vmatpush1.msra.mxu0 %v361
        %407 = vmatprep.subr.mxu0 0.0
        %408 = vmatpush1.msra.mxu0 0.0
        %409 = vmatprep.subr.mxu0 0.0
        %410 = vmatpush1.msra.mxu0 0.0
        %411 = vmatprep.subr.mxu0 0.0
        %412 = vmatpush1.msra.mxu0 0.0
        %413 = vmatprep.subr.mxu0 0.0
        %414 = vmatpush1.msra.mxu0 0.0
        %415 = vmatprep.subr.mxu0 0.0
        %416 = vmatpush1.msra.mxu0 0.0
        %417 = vmatprep.subr.mxu0 0.0
        %418 = vmatpush1.msra.mxu0 0.0
        %419 = vmatprep.subr.mxu0 0.0
        %420 = vmatpush1.msra.mxu0 0.0
        %421 = vmatprep.subr.mxu0 0.0
        %422 = vmatpush1.msra.mxu0 0.0
        %423 = vmatprep.subr.mxu0 0.0
        %424 = vmatpush1.msra.mxu0 0.0
        %425 = vmatprep.subr.mxu0 0.0
        %426 = vmatpush1.msra.mxu0 0.0
        %427 = vmatprep.subr.mxu0 0.0
        %428 = vmatpush1.msra.mxu0 0.0
        %429 = vmatprep.subr.mxu0 0.0
        %430 = vmatpush1.msra.mxu0 0.0
        %431 = vmatprep.subr.mxu0 0.0
        %432 = vmatpush1.msra.mxu0 0.0
        %433 = vmatprep.subr.mxu0 0.0
        %434 = vmatpush1.msra.mxu0 0.0
        %435 = vmatprep.subr.mxu0 0.0
        %436 = vmatpush1.msra.mxu0 0.0
        %437 = vmatprep.subr.mxu0 0.0
        %438 = vmatpush1.msra.mxu0 0.0
        %439 = vmatprep.mubr.f32.mxu0 0.0
        %440 = vmatmul.mubr.f32.gmra.mrb[0].mxu0 %v329
        %v441 = vpop.f32.mrb[0].mxu0
        %v442 = vadd.f32 %v368, %v441
        %v443 = vpop.f32.mrb[0].mxu0
        %v444 = vadd.f32 %v372, %v443
        %445 = vmatprep.mubr.f32.mxu0 0.0
        %446 = vmatmul.mubr.f32.gmra.mrb[0].mxu0 %v330
        %v447 = vpop.f32.mrb[0].mxu0
        %v448 = vadd.f32 %v368, %v447
        %v449 = vpop.f32.mrb[0].mxu0
        %v450 = vadd.f32 %v372, %v449
        %451 = vdwg.mxu0
        %v452 = vmul.f32 %v442, 0.5
        %v453 = vmul.f32 %v444, 0.5
        %v454 = vmul.f32 %v448, 0.5
        %v455 = vmul.f32 %v450, 0.5
        %v456 = vmul.f32 %v442, 0.70710677
        %v457 = vmul.f32 %v444, 0.70710677
        %v458 = vmul.f32 %v448, 0.70710677
        %v459 = vmul.f32 %v450, 0.70710677
        %v460 = verf.f32.pop %v456
        %v461 = verf.f32.pop %v457
        %v462 = verf.f32.pop %v458
        %v463 = verf.f32.pop %v459
        %v464 = vadd.f32 %v460, 1.0
        %v465 = vadd.f32 %v461, 1.0
        %v466 = vadd.f32 %v462, 1.0
        %v467 = vadd.f32 %v463, 1.0
        %v468 = vmul.f32 %v452, %v464
        %v469 = vmul.f32 %v453, %v465
        %v470 = vmul.f32 %v454, %v466
        %v471 = vmul.f32 %v455, %v467
        %v472 = vld [vmem:[#allocation2] sm:$0xff]
        %v473 = vld [vmem:[#allocation2 + $0x8] sm:$0xff]
        %v474 = vld [vmem:[#allocation8] sm:$0xff]
        %v475 = vld [vmem:[#allocation8 + $0x8] sm:$0xff]
        %v476 = vld [vmem:[#allocation8 + $0x10] sm:$0xff]
        %v477 = vld [vmem:[#allocation8 + $0x18] sm:$0xff]
        %v478 = vld [vmem:[#allocation8 + $0x20] sm:$0xff]
        %v479 = vld [vmem:[#allocation8 + $0x28] sm:$0xff]
        %v480 = vld [vmem:[#allocation8 + $0x30] sm:$0xff]
        %v481 = vld [vmem:[#allocation8 + $0x38] sm:$0xff]
        %v482 = vld [vmem:[#allocation8 + $0x40] sm:$0xff]
        %v483 = vld [vmem:[#allocation8 + $0x48] sm:$0xff]
        %v484 = vld [vmem:[#allocation8 + $0x50] sm:$0xff]
        %v485 = vld [vmem:[#allocation8 + $0x58] sm:$0xff]
        %v486 = vld [vmem:[#allocation8 + $0x60] sm:$0xff]
        %v487 = vld [vmem:[#allocation8 + $0x68] sm:$0xff]
        %v488 = vld [vmem:[#allocation8 + $0x70] sm:$0xff]
        %v489 = vld [vmem:[#allocation8 + $0x78] sm:$0xff]
        %v490 = vld [vmem:[#allocation8 + $0x80] sm:$0xff]
        %v491 = vld [vmem:[#allocation8 + $0x88] sm:$0xff]
        %v492 = vld [vmem:[#allocation8 + $0x90] sm:$0xff]
        %v493 = vld [vmem:[#allocation8 + $0x98] sm:$0xff]
        %v494 = vld [vmem:[#allocation8 + $0xa0] sm:$0xff]
        %v495 = vld [vmem:[#allocation8 + $0xa8] sm:$0xff]
        %v496 = vld [vmem:[#allocation8 + $0xb0] sm:$0xff]
        %v497 = vld [vmem:[#allocation8 + $0xb8] sm:$0xff]
        %v498 = vld [vmem:[#allocation8 + $0xc0] sm:$0xff]
        %v499 = vld [vmem:[#allocation8 + $0xc8] sm:$0xff]
        %v500 = vld [vmem:[#allocation8 + $0xd0] sm:$0xff]
        %v501 = vld [vmem:[#allocation8 + $0xd8] sm:$0xff]
        %v502 = vld [vmem:[#allocation8 + $0xe0] sm:$0xff]
        %v503 = vld [vmem:[#allocation8 + $0xe8] sm:$0xff]
        %v504 = vld [vmem:[#allocation8 + $0xf0] sm:$0xff]
        %v505 = vld [vmem:[#allocation8 + $0xf8] sm:$0xff]
        %506 = vmatprep.subr.mxu0 0.0
        %507 = vmatpush1.msra.mxu0 %v474
        %508 = vmatprep.subr.mxu0 0.0
        %509 = vmatpush1.msra.mxu0 %v475
        %510 = vmatprep.subr.mxu0 0.0
        %511 = vmatpush1.msra.mxu0 %v476
        %512 = vmatprep.subr.mxu0 0.0
        %513 = vmatpush1.msra.mxu0 %v477
        %514 = vmatprep.subr.mxu0 0.0
        %515 = vmatpush1.msra.mxu0 %v478
        %516 = vmatprep.subr.mxu0 0.0
        %517 = vmatpush1.msra.mxu0 %v479
        %518 = vmatprep.subr.mxu0 0.0
        %519 = vmatpush1.msra.mxu0 %v480
        %520 = vmatprep.subr.mxu0 0.0
        %521 = vmatpush1.msra.mxu0 %v481
        %522 = vmatprep.subr.mxu0 0.0
        %523 = vmatpush1.msra.mxu0 %v482
        %524 = vmatprep.subr.mxu0 0.0
        %525 = vmatpush1.msra.mxu0 %v483
        %526 = vmatprep.subr.mxu0 0.0
        %527 = vmatpush1.msra.mxu0 %v484
        %528 = vmatprep.subr.mxu0 0.0
        %529 = vmatpush1.msra.mxu0 %v485
        %530 = vmatprep.subr.mxu0 0.0
        %531 = vmatpush1.msra.mxu0 %v486
        %532 = vmatprep.subr.mxu0 0.0
        %533 = vmatpush1.msra.mxu0 %v487
        %534 = vmatprep.subr.mxu0 0.0
        %535 = vmatpush1.msra.mxu0 %v488
        %536 = vmatprep.subr.mxu0 0.0
        %537 = vmatpush1.msra.mxu0 %v489
        %538 = vmatprep.subr.mxu0 0.0
        %539 = vmatpush1.msra.mxu0 %v490
        %540 = vmatprep.subr.mxu0 0.0
        %541 = vmatpush1.msra.mxu0 %v491
        %542 = vmatprep.subr.mxu0 0.0
        %543 = vmatpush1.msra.mxu0 %v492
        %544 = vmatprep.subr.mxu0 0.0
        %545 = vmatpush1.msra.mxu0 %v493
        %546 = vmatprep.subr.mxu0 0.0
        %547 = vmatpush1.msra.mxu0 %v494
        %548 = vmatprep.subr.mxu0 0.0
        %549 = vmatpush1.msra.mxu0 %v495
        %550 = vmatprep.subr.mxu0 0.0
        %551 = vmatpush1.msra.mxu0 %v496
        %552 = vmatprep.subr.mxu0 0.0
        %553 = vmatpush1.msra.mxu0 %v497
        %554 = vmatprep.subr.mxu0 0.0
        %555 = vmatpush1.msra.mxu0 %v498
        %556 = vmatprep.subr.mxu0 0.0
        %557 = vmatpush1.msra.mxu0 %v499
        %558 = vmatprep.subr.mxu0 0.0
        %559 = vmatpush1.msra.mxu0 %v500
        %560 = vmatprep.subr.mxu0 0.0
        %561 = vmatpush1.msra.mxu0 %v501
        %562 = vmatprep.subr.mxu0 0.0
        %563 = vmatpush1.msra.mxu0 %v502
        %564 = vmatprep.subr.mxu0 0.0
        %565 = vmatpush1.msra.mxu0 %v503
        %566 = vmatprep.subr.mxu0 0.0
        %567 = vmatpush1.msra.mxu0 %v504
        %568 = vmatprep.subr.mxu0 0.0
        %569 = vmatpush1.msra.mxu0 %v505
        %570 = vmatprep.mubr.f32.mxu0 %v469
        %571 = vmatmul.mubr.f32.gmra.mrb[0].mxu0 %v468
        %v572 = vpop.f32.mrb[0].mxu0
        %v573 = vadd.f32 0.0, %v572
        %v574 = vpop.f32.mrb[0].mxu0
        %575 = vmatprep.mubr.f32.mxu0 %v471
        %576 = vmatmul.mubr.f32.gmra.mrb[0].mxu0 %v470
        %v577 = vpop.f32.mrb[0].mxu0
        %v578 = vadd.f32 0.0, %v577
        %v579 = vpop.f32.mrb[0].mxu0
        %580 = vdwg.mxu0
        %v581 = vadd.f32 %v472, %v573
        %v582 = vadd.f32 %v473, %v578
        %583 = vst [vmem:[#allocation2] sm:$0xff] %v581
        %584 = vst [vmem:[#allocation2 + $0x8] sm:$0xff] %v582
        // Predicated region
        $region57: #{tpu_custom_call.1} parent=39 // pred_check
          %p585 = pneg %p323
        $region58: #{tpu_custom_call.1} parent=39 // pred_check_branch
          %587 = sbr.rel (%p585) target = $region60
        $region59: #{tpu_custom_call.1} parent=39 // pred_region
          %v588 = vld [vmem:[%s4] sm:$0x7]
          %v589 = vld [vmem:[#allocation2] sm:$0xff]
          %v590 = vld [vmem:[#allocation2 + $0x8] sm:$0xff]
          %v591 = vlaneseq
          %v592 = vshrl.u32 %v591, 7
          %v593 = vsub.s32 0, %v592
          %v594 = vrot.slane %v588, %v593
          %v595 = vadd.f32 %v589, %v594
          %v596 = vadd.f32 %v590, %v594
          %597 = vadd.xlane.f32.xlu0 %v595
          %v598 = vpop.xlane.xlu0 %597
          %599 = vadd.xlane.f32.xlu0 %v596
          %v600 = vpop.xlane.xlu0 %599
          %v601 = vrcp.pop 128.0
          %v602 = vmul.f32 %v598, %v601
          %v603 = vmul.f32 %v600, %v601
          %v604 = vsub.f32 %v595, %v602
          %v605 = vsub.f32 %v596, %v603
          %v606 = vmul.f32 %v604, %v604
          %v607 = vmul.f32 %v605, %v605
          %608 = vadd.xlane.f32.xlu0 %v606
          %v609 = vpop.xlane.xlu0 %608
          %610 = vadd.xlane.f32.xlu0 %v607
          %v611 = vpop.xlane.xlu0 %610
          %v612 = vmul.f32 %v609, %v601
          %v613 = vmul.f32 %v611, %v601
          %v614 = vadd.f32 %v612, 1e-05
          %v615 = vadd.f32 %v613, 1e-05
          %v616 = vrsqrt.pop %v614
          %v617 = vrsqrt.pop %v615
          %v618 = vmul.f32 %v604, %v616
          %v619 = vmul.f32 %v605, %v617
          %v620 = vlaneseq
          %v621 = vshrl.u32 %v620, 7
          %v622 = vsub.s32 1, %v621
          %v623 = vrot.slane %v588, %v622
          %v624 = vmul.f32 %v618, %v623
          %v625 = vmul.f32 %v619, %v623
          %v626 = vlaneseq
          %v627 = vshrl.u32 %v626, 7
          %v628 = vsub.s32 2, %v627
          %v629 = vrot.slane %v588, %v628
          %v630 = vadd.f32 %v624, %v629
          %v631 = vadd.f32 %v625, %v629
          %632 = vst [vmem:[%s313] sm:$0xff] %v630
          %633 = vst [vmem:[%s313 + $0x8] sm:$0xff] %v631
        $region60: #{tpu_custom_call.1} parent=39 // pred_fallthru
          _
        %s634 = sand.u32 %s168, 1
        %s635 = scalar_lea.sflag [#allocation5], %s634
        %s636 = sand.u32 %s168, 1
        %s637 = smul.addr %s636, 16
        %s638 = scalar_lea.vmem [#allocation9], %s637
        // Predicated region
        $region61: #{tpu_custom_call.1} parent=39 // pred_check
          %p639 = pneg %p178
        $region62: #{tpu_custom_call.1} parent=39 // pred_check_branch
          %641 = sbr.rel (%p639) target = $region64
        $region63: #{tpu_custom_call.1} parent=39 // pred_region
          %s642 = smul.u32 2, %s27
          %s644 = ssub.s32 256, 256
          %645 = vsyncadd %s635, %s644
          %s646 = smul.addr %s642, 128
          %s647 = scalar_lea.hbm %s5, %s646
          %s648 = sshll.u32 %s638, 4
          %s649 = int_to_ptr.vmem [resolvable:$true] %s648
          %654 = dma.vmem_to_hbm [thread:$0]  %s649, 256, %s647, %s635, 128, 128, 8
        $region64: #{tpu_custom_call.1} parent=39 // pred_fallthru
          _
      $region40: #{tpu_custom_call.1} parent=5 // pred_fallthru
        _
      %p655 = scmp.le.s32.totalorder 2, %s18
      // Predicated region
      $region65: #{tpu_custom_call.1} parent=5 // pred_check
        %p656 = pneg %p655
      $region66: #{tpu_custom_call.1} parent=5 // pred_check_branch
        %658 = sbr.rel (%p656) target = $region68
      $region67: #{tpu_custom_call.1} parent=5 // pred_region
        %s659 = ssub.s32 %s18, 2
        // Predicated region
        $region69: #{tpu_custom_call.1} parent=67 // pred_check
          %p660 = pneg %p184
        $region70: #{tpu_custom_call.1} parent=67 // pred_check_branch
          %662 = sbr.rel (%p660) target = $region72
        $region71: #{tpu_custom_call.1} parent=67 // pred_region
          %s663 = sand.u32 %s169, 1
          %s664 = scalar_lea.sflag [#allocation5], %s663
          %s665 = sand.u32 %s169, 1
          %s666 = smul.addr %s665, 16
          %s667 = scalar_lea.vmem [#allocation9], %s666
          %668 = dma.done %s664, 256
        $region72: #{tpu_custom_call.1} parent=67 // pred_fallthru
          _
      $region68: #{tpu_custom_call.1} parent=5 // pred_fallthru
        _
    $region6: #{tpu_custom_call.1} parent=1 // loop_footer
      %s22 = sadd.s32 1, %s18
    $region7: #{tpu_custom_call.1} parent=1 // loop_footer_branch
      %17 = sbr.rel target = $region3
    $region8: #{tpu_custom_call.1} parent=1 // loop_exit
      _
    %669 = vsyncpa [#allocation4], 1
    %s670 = scalar_lea.sflag [#allocation4], 1
    %671 = vsyncpa %s670, 1
    %672 = vsyncpa [#allocation7], 1
    %673 = vsyncpa [#allocation5], 1
    %s674 = scalar_lea.sflag [#allocation5], 1
    %675 = vsyncpa %s674, 1

</llo_original>
